<compile_context>
chip_gen: v7x
topology: tpu7x:2x2x1
jax: 0.10.0
libtpu: 0.0.40
codegen_flags: <defaults>
</compile_context>

<pallas_src>
import jax
import jax.numpy as jnp
import numpy as np
from jax.experimental import pallas as pl
from jax.experimental.pallas import tpu as pltpu

SUM_LANES = 128  # lane-dense block appended for the masked word sums (first E valid)


def _input_module_kernel(tgt_ref, we_ref, pos_ref, out_ref, tbl_ref):
    """Single invocation, whole arrays in VMEM.

    tgt_ref : [Rp, Wm*V] int32  column target per (row, word, vocab) slot (-1 = pad)
    we_ref  : [V, E]     f32    word embedding table
    pos_ref : [Wm, E]    f32    positional scaling rows
    out_ref : [Rp, Wm*E + SUM_LANES] f32
              lanes [0, Wm*E)           -> pos-scaled embeddings per word slot
              lanes [Wm*E, Wm*E+E)      -> masked (token != 0) word sums
    tbl_ref : [Wm*V, Wm*E + SUM_LANES] f32 scratch (fused gather/scale/sum table)
    """
    R, WV = tgt_ref.shape
    V, E = we_ref.shape
    Wm = pos_ref.shape[0]

    # ---- build the fused table in VMEM scratch (parameter-only, tiny) ------
    tbl_ref[...] = jnp.zeros(tbl_ref.shape, jnp.float32)
    we = we_ref[...]                                               # [V, E]
    row_iota = jax.lax.broadcasted_iota(jnp.int32, (V, E), 0)
    we_nz = jnp.where(row_iota == 0, 0.0, we)                      # PAD row zeroed
    for w in range(Wm):                                            # static unroll, Wm small
        pos_row = pos_ref[pl.ds(w, 1), :]                          # [1, E]
        # embedding block:  tbl[w*V + v, w*E + e] = we[v, e] * pos[w, e]
        tbl_ref[pl.ds(w * V, V), pl.ds(w * E, E)] = we * pos_row
        # sum block:        tbl[w*V + v, Wm*E + e] = (v != 0) * we[v, e] * pos[w, e]
        tbl_ref[pl.ds(w * V, V), pl.ds(Wm * E, E)] = we_nz * pos_row

    # ---- one fused gather + positional-scale + masked-sum matmul -----------
    col = jax.lax.broadcasted_iota(jnp.int32, (R, WV), 1)
    onehot = (col == tgt_ref[...]).astype(jnp.float32)             # [Rp, Wm*V]
    out_ref[...] = jnp.dot(onehot, tbl_ref[...],
                           preferred_element_type=jnp.float32,
                           precision=jax.lax.Precision.HIGHEST)    # [Rp, Wm*E+128]


def input_module_forward(story, query, word_embed, pos_embed):
    """Same semantics as the PyTorch InputModule.forward.

    Returns (sentence_embed, query_embed, sentence_mask, query_mask,
             sentence_sum, query_sum).
    """
    B, S, W = story.shape
    _, Wq = query.shape
    V, E = word_embed.shape
    Wm = max(W, Wq)
    assert pos_embed.shape[0] >= Wm

    R_s = B * S                      # story rows (one per sentence)
    R = R_s + B                      # + query rows (one per batch element)
    Rp = ((R + 7) // 8) * 8          # pad rows to a sublane multiple

    word_embed = word_embed.astype(jnp.float32)
    pos = pos_embed[:Wm].astype(jnp.float32)                       # [Wm, E]

    # expanded one-hot column targets: tgt[r, w*V + v] = w*V + token[r, w]
    # (input-dependent, so this tiny prep stays per-call; all parameter-only
    #  prep now lives inside the kernel)
    def expanded_targets(tokens, width):
        offs = jnp.arange(width, dtype=jnp.int32) * V
        tgt = tokens.astype(jnp.int32) + offs[None, :]             # [rows, width]
        if width < Wm:
            tgt = jnp.concatenate(
                [tgt, jnp.full((tokens.shape[0], Wm - width), -1, jnp.int32)],
                axis=1)
        return jnp.repeat(tgt, V, axis=1)                          # [rows, Wm*V]

    targets = jnp.concatenate(
        [expanded_targets(story.reshape(R_s, W), W),
         expanded_targets(query.reshape(B, Wq), Wq)], axis=0)      # [R, Wm*V]
    if Rp > R:
        targets = jnp.concatenate(
            [targets, jnp.full((Rp - R, Wm * V), -1, jnp.int32)], axis=0)

    # ---- kernel call: no grid, whole arrays in VMEM (footprint << 1 MiB) ---
    vmem = pl.BlockSpec(memory_space=pltpu.MemorySpace.VMEM)
    out = pl.pallas_call(
        _input_module_kernel,
        out_shape=jax.ShapeDtypeStruct((Rp, Wm * E + SUM_LANES), jnp.float32),
        in_specs=[vmem, vmem, vmem],
        out_specs=vmem,
        scratch_shapes=[pltpu.VMEM((Wm * V, Wm * E + SUM_LANES), jnp.float32)],
    )(targets, word_embed, pos)

    sentence_embed = out[:R_s, :W * E].reshape(B, S, W, E)
    query_embed = out[R_s:R, :Wq * E].reshape(B, Wq, E)
    sentence_sum = out[:R_s, Wm * E:Wm * E + E].reshape(B, S, E)
    query_sum = out[R_s:R, Wm * E:Wm * E + E]
    sentence_mask = story != 0
    query_mask = query != 0
    return (sentence_embed, query_embed, sentence_mask, query_mask,
            sentence_sum, query_sum)


if __name__ == "__main__":
    # config (small, consistent with the module)
    vocab_size = 32
    symbol_size = 32      # E
    max_seq = 8           # words per sentence (pos_embed rows)
    init_limit = 0.1
    B, S, W, Wq = 2, 8, 8, 8

    key = jax.random.PRNGKey(0)
    k_emb, k_story, k_query = jax.random.split(key, 3)

    # parameters (deterministic, matching __init__)
    word_embed = jax.random.uniform(k_emb, (vocab_size, symbol_size),
                                    minval=-init_limit, maxval=init_limit,
                                    dtype=jnp.float32)
    pos_embed = jnp.ones((max_seq, symbol_size), jnp.float32) / max_seq

    # inputs (include zeros so the masks matter)
    story = jax.random.randint(k_story, (B, S, W), 0, vocab_size, dtype=jnp.int32)
    query = jax.random.randint(k_query, (B, Wq), 0, vocab_size, dtype=jnp.int32)

    fwd = jax.jit(input_module_forward)
    outs = jax.block_until_ready(fwd(story, query, word_embed, pos_embed))
    se, qe, sm, qm, ss, qs = outs

    # pure-JAX reference (elementwise only -> exact f32) for correctness
    ref_se = word_embed[story] * pos_embed[:W][None, None, :, :]
    ref_sm = story != 0
    ref_ss = (ref_se * ref_sm.astype(jnp.float32)[..., None]).sum(axis=2)
    ref_qe = word_embed[query] * pos_embed[:Wq][None, :, :]
    ref_qm = query != 0
    ref_qs = (ref_qe * ref_qm.astype(jnp.float32)[..., None]).sum(axis=1)

    assert np.allclose(np.asarray(se), np.asarray(ref_se), atol=1e-5)
    assert np.allclose(np.asarray(qe), np.asarray(ref_qe), atol=1e-5)
    assert np.array_equal(np.asarray(sm), np.asarray(ref_sm))
    assert np.array_equal(np.asarray(qm), np.asarray(ref_qm))
    assert np.allclose(np.asarray(ss), np.asarray(ref_ss), atol=1e-5)
    assert np.allclose(np.asarray(qs), np.asarray(ref_qs), atol=1e-5)

    print("KERNEL_OK")
</pallas_src>

<mosaic_0001>
module attributes {stable_mosaic.version = 11 : i64} {
  func.func @_input_module_kernel(%arg0: memref<24x256xi32, #tpu.memory_space<vmem>>, %arg1: memref<32x32xf32, #tpu.memory_space<vmem>>, %arg2: memref<8x32xf32, #tpu.memory_space<vmem>>, %arg3: memref<24x384xf32, #tpu.memory_space<vmem>>, %arg4: memref<256x384xf32, #tpu.memory_space<vmem>>) attributes {dimension_semantics = [], scalar_prefetch = 0 : i64, scratch_operands = 1 : i64, tpu.core_type = #tpu.core_type<tc>} {
    %cst = arith.constant 0.000000e+00 : f32
    %0 = vector.broadcast %cst : f32 to vector<256x384xf32>
    %c0 = arith.constant 0 : index
    %c0_0 = arith.constant 0 : index
    %1 = vector.load %arg4[%c0, %c0_0] : memref<256x384xf32, #tpu.memory_space<vmem>>, vector<256x384xf32>
    tpu.vector_store %arg4[%c0, %c0_0], %0 {strides = array<i32>} : memref<256x384xf32, #tpu.memory_space<vmem>>, vector<256x384xf32>,
    %c0_1 = arith.constant 0 : index
    %c0_2 = arith.constant 0 : index
    %2 = vector.load %arg1[%c0_1, %c0_2] : memref<32x32xf32, #tpu.memory_space<vmem>>, vector<32x32xf32>
    %3 = tpu.iota {dimensions = array<i32: 0>} : vector<32x32xi32>
    %c0_i32 = arith.constant 0 : i32
    %4 = vector.broadcast %c0_i32 : i32 to vector<32x32xi32>
    %5 = arith.cmpi eq, %3, %4 : vector<32x32xi32>
    %cst_3 = arith.constant 0.000000e+00 : f32
    %6 = vector.broadcast %cst_3 : f32 to vector<32x32xf32>
    %7 = arith.select %5, %6, %2 : vector<32x32xi1>, vector<32x32xf32>
    %c0_4 = arith.constant 0 : index
    %c0_5 = arith.constant 0 : index
    %8 = vector.load %arg2[%c0_4, %c0_5] : memref<8x32xf32, #tpu.memory_space<vmem>>, vector<1x32xf32>
    %9 = vector.broadcast %8 : vector<1x32xf32> to vector<32x32xf32>
    %10 = arith.mulf %2, %9 : vector<32x32xf32>
    %c0_6 = arith.constant 0 : index
    %c0_7 = arith.constant 0 : index
    %11 = vector.load %arg4[%c0_6, %c0_7] : memref<256x384xf32, #tpu.memory_space<vmem>>, vector<32x32xf32>
    tpu.vector_store %arg4[%c0_6, %c0_7], %10 {strides = array<i32>} : memref<256x384xf32, #tpu.memory_space<vmem>>, vector<32x32xf32>,
    %12 = vector.broadcast %8 : vector<1x32xf32> to vector<32x32xf32>
    %13 = arith.mulf %7, %12 : vector<32x32xf32>
    %c0_8 = arith.constant 0 : index
    %c256 = arith.constant 256 : index
    %14 = vector.load %arg4[%c0_8, %c256] : memref<256x384xf32, #tpu.memory_space<vmem>>, vector<32x32xf32>
    tpu.vector_store %arg4[%c0_8, %c256], %13 {strides = array<i32>} : memref<256x384xf32, #tpu.memory_space<vmem>>, vector<32x32xf32>,
    %c1 = arith.constant 1 : index
    %c0_9 = arith.constant 0 : index
    %15 = vector.load %arg2[%c1, %c0_9] : memref<8x32xf32, #tpu.memory_space<vmem>>, vector<1x32xf32>
    %16 = vector.broadcast %15 : vector<1x32xf32> to vector<32x32xf32>
    %17 = arith.mulf %2, %16 : vector<32x32xf32>
    %c32 = arith.constant 32 : index
    %c32_10 = arith.constant 32 : index
    %18 = vector.load %arg4[%c32, %c32_10] : memref<256x384xf32, #tpu.memory_space<vmem>>, vector<32x32xf32>
    tpu.vector_store %arg4[%c32, %c32_10], %17 {strides = array<i32>} : memref<256x384xf32, #tpu.memory_space<vmem>>, vector<32x32xf32>,
    %19 = vector.broadcast %15 : vector<1x32xf32> to vector<32x32xf32>
    %20 = arith.mulf %7, %19 : vector<32x32xf32>
    %c32_11 = arith.constant 32 : index
    %c256_12 = arith.constant 256 : index
    %21 = vector.load %arg4[%c32_11, %c256_12] : memref<256x384xf32, #tpu.memory_space<vmem>>, vector<32x32xf32>
    tpu.vector_store %arg4[%c32_11, %c256_12], %20 {strides = array<i32>} : memref<256x384xf32, #tpu.memory_space<vmem>>, vector<32x32xf32>,
    %c2 = arith.constant 2 : index
    %c0_13 = arith.constant 0 : index
    %22 = vector.load %arg2[%c2, %c0_13] : memref<8x32xf32, #tpu.memory_space<vmem>>, vector<1x32xf32>
    %23 = vector.broadcast %22 : vector<1x32xf32> to vector<32x32xf32>
    %24 = arith.mulf %2, %23 : vector<32x32xf32>
    %c64 = arith.constant 64 : index
    %c64_14 = arith.constant 64 : index
    %25 = vector.load %arg4[%c64, %c64_14] : memref<256x384xf32, #tpu.memory_space<vmem>>, vector<32x32xf32>
    tpu.vector_store %arg4[%c64, %c64_14], %24 {strides = array<i32>} : memref<256x384xf32, #tpu.memory_space<vmem>>, vector<32x32xf32>,
    %26 = vector.broadcast %22 : vector<1x32xf32> to vector<32x32xf32>
    %27 = arith.mulf %7, %26 : vector<32x32xf32>
    %c64_15 = arith.constant 64 : index
    %c256_16 = arith.constant 256 : index
    %28 = vector.load %arg4[%c64_15, %c256_16] : memref<256x384xf32, #tpu.memory_space<vmem>>, vector<32x32xf32>
    tpu.vector_store %arg4[%c64_15, %c256_16], %27 {strides = array<i32>} : memref<256x384xf32, #tpu.memory_space<vmem>>, vector<32x32xf32>,
    %c3 = arith.constant 3 : index
    %c0_17 = arith.constant 0 : index
    %29 = vector.load %arg2[%c3, %c0_17] : memref<8x32xf32, #tpu.memory_space<vmem>>, vector<1x32xf32>
    %30 = vector.broadcast %29 : vector<1x32xf32> to vector<32x32xf32>
    %31 = arith.mulf %2, %30 : vector<32x32xf32>
    %c96 = arith.constant 96 : index
    %c96_18 = arith.constant 96 : index
    %32 = vector.load %arg4[%c96, %c96_18] : memref<256x384xf32, #tpu.memory_space<vmem>>, vector<32x32xf32>
    tpu.vector_store %arg4[%c96, %c96_18], %31 {strides = array<i32>} : memref<256x384xf32, #tpu.memory_space<vmem>>, vector<32x32xf32>,
    %33 = vector.broadcast %29 : vector<1x32xf32> to vector<32x32xf32>
    %34 = arith.mulf %7, %33 : vector<32x32xf32>
    %c96_19 = arith.constant 96 : index
    %c256_20 = arith.constant 256 : index
    %35 = vector.load %arg4[%c96_19, %c256_20] : memref<256x384xf32, #tpu.memory_space<vmem>>, vector<32x32xf32>
    tpu.vector_store %arg4[%c96_19, %c256_20], %34 {strides = array<i32>} : memref<256x384xf32, #tpu.memory_space<vmem>>, vector<32x32xf32>,
    %c4 = arith.constant 4 : index
    %c0_21 = arith.constant 0 : index
    %36 = vector.load %arg2[%c4, %c0_21] : memref<8x32xf32, #tpu.memory_space<vmem>>, vector<1x32xf32>
    %37 = vector.broadcast %36 : vector<1x32xf32> to vector<32x32xf32>
    %38 = arith.mulf %2, %37 : vector<32x32xf32>
    %c128 = arith.constant 128 : index
    %c128_22 = arith.constant 128 : index
    %39 = vector.load %arg4[%c128, %c128_22] : memref<256x384xf32, #tpu.memory_space<vmem>>, vector<32x32xf32>
    tpu.vector_store %arg4[%c128, %c128_22], %38 {strides = array<i32>} : memref<256x384xf32, #tpu.memory_space<vmem>>, vector<32x32xf32>,
    %40 = vector.broadcast %36 : vector<1x32xf32> to vector<32x32xf32>
    %41 = arith.mulf %7, %40 : vector<32x32xf32>
    %c128_23 = arith.constant 128 : index
    %c256_24 = arith.constant 256 : index
    %42 = vector.load %arg4[%c128_23, %c256_24] : memref<256x384xf32, #tpu.memory_space<vmem>>, vector<32x32xf32>
    tpu.vector_store %arg4[%c128_23, %c256_24], %41 {strides = array<i32>} : memref<256x384xf32, #tpu.memory_space<vmem>>, vector<32x32xf32>,
    %c5 = arith.constant 5 : index
    %c0_25 = arith.constant 0 : index
    %43 = vector.load %arg2[%c5, %c0_25] : memref<8x32xf32, #tpu.memory_space<vmem>>, vector<1x32xf32>
    %44 = vector.broadcast %43 : vector<1x32xf32> to vector<32x32xf32>
    %45 = arith.mulf %2, %44 : vector<32x32xf32>
    %c160 = arith.constant 160 : index
    %c160_26 = arith.constant 160 : index
    %46 = vector.load %arg4[%c160, %c160_26] : memref<256x384xf32, #tpu.memory_space<vmem>>, vector<32x32xf32>
    tpu.vector_store %arg4[%c160, %c160_26], %45 {strides = array<i32>} : memref<256x384xf32, #tpu.memory_space<vmem>>, vector<32x32xf32>,
    %47 = vector.broadcast %43 : vector<1x32xf32> to vector<32x32xf32>
    %48 = arith.mulf %7, %47 : vector<32x32xf32>
    %c160_27 = arith.constant 160 : index
    %c256_28 = arith.constant 256 : index
    %49 = vector.load %arg4[%c160_27, %c256_28] : memref<256x384xf32, #tpu.memory_space<vmem>>, vector<32x32xf32>
    tpu.vector_store %arg4[%c160_27, %c256_28], %48 {strides = array<i32>} : memref<256x384xf32, #tpu.memory_space<vmem>>, vector<32x32xf32>,
    %c6 = arith.constant 6 : index
    %c0_29 = arith.constant 0 : index
    %50 = vector.load %arg2[%c6, %c0_29] : memref<8x32xf32, #tpu.memory_space<vmem>>, vector<1x32xf32>
    %51 = vector.broadcast %50 : vector<1x32xf32> to vector<32x32xf32>
    %52 = arith.mulf %2, %51 : vector<32x32xf32>
    %c192 = arith.constant 192 : index
    %c192_30 = arith.constant 192 : index
    %53 = vector.load %arg4[%c192, %c192_30] : memref<256x384xf32, #tpu.memory_space<vmem>>, vector<32x32xf32>
    tpu.vector_store %arg4[%c192, %c192_30], %52 {strides = array<i32>} : memref<256x384xf32, #tpu.memory_space<vmem>>, vector<32x32xf32>,
    %54 = vector.broadcast %50 : vector<1x32xf32> to vector<32x32xf32>
    %55 = arith.mulf %7, %54 : vector<32x32xf32>
    %c192_31 = arith.constant 192 : index
    %c256_32 = arith.constant 256 : index
    %56 = vector.load %arg4[%c192_31, %c256_32] : memref<256x384xf32, #tpu.memory_space<vmem>>, vector<32x32xf32>
    tpu.vector_store %arg4[%c192_31, %c256_32], %55 {strides = array<i32>} : memref<256x384xf32, #tpu.memory_space<vmem>>, vector<32x32xf32>,
    %c7 = arith.constant 7 : index
    %c0_33 = arith.constant 0 : index
    %57 = vector.load %arg2[%c7, %c0_33] : memref<8x32xf32, #tpu.memory_space<vmem>>, vector<1x32xf32>
    %58 = vector.broadcast %57 : vector<1x32xf32> to vector<32x32xf32>
    %59 = arith.mulf %2, %58 : vector<32x32xf32>
    %c224 = arith.constant 224 : index
    %c224_34 = arith.constant 224 : index
    %60 = vector.load %arg4[%c224, %c224_34] : memref<256x384xf32, #tpu.memory_space<vmem>>, vector<32x32xf32>
    tpu.vector_store %arg4[%c224, %c224_34], %59 {strides = array<i32>} : memref<256x384xf32, #tpu.memory_space<vmem>>, vector<32x32xf32>,
    %61 = vector.broadcast %57 : vector<1x32xf32> to vector<32x32xf32>
    %62 = arith.mulf %7, %61 : vector<32x32xf32>
    %c224_35 = arith.constant 224 : index
    %c256_36 = arith.constant 256 : index
    %63 = vector.load %arg4[%c224_35, %c256_36] : memref<256x384xf32, #tpu.memory_space<vmem>>, vector<32x32xf32>
    tpu.vector_store %arg4[%c224_35, %c256_36], %62 {strides = array<i32>} : memref<256x384xf32, #tpu.memory_space<vmem>>, vector<32x32xf32>,
    %64 = tpu.iota {dimensions = array<i32: 1>} : vector<24x256xi32>
    %c0_37 = arith.constant 0 : index
    %c0_38 = arith.constant 0 : index
    %65 = vector.load %arg0[%c0_37, %c0_38] : memref<24x256xi32, #tpu.memory_space<vmem>>, vector<24x256xi32>
    %66 = arith.cmpi eq, %64, %65 : vector<24x256xi32>
    %67 = arith.extui %66 : vector<24x256xi1> to vector<24x256xi32>
    %68 = arith.sitofp %67 : vector<24x256xi32> to vector<24x256xf32>
    %c0_39 = arith.constant 0 : index
    %c0_40 = arith.constant 0 : index
    %69 = vector.load %arg4[%c0_39, %c0_40] : memref<256x384xf32, #tpu.memory_space<vmem>>, vector<256x384xf32>
    %cst_41 = arith.constant dense<0.000000e+00> : vector<24x384xf32>
    %70 = tpu.matmul %68, %69, %cst_41 {dimension_numbers = #tpu.dot_dimension_numbers<[1], [0], [0], [1], [0, 0, 1, 1], [], []>, precision = #tpu.contract_precision<fp32>} : vector<24x256xf32>, vector<256x384xf32>, vector<24x384xf32> -> vector<24x384xf32>
    %c0_42 = arith.constant 0 : index
    %c0_43 = arith.constant 0 : index
    %71 = vector.load %arg3[%c0_42, %c0_43] : memref<24x384xf32, #tpu.memory_space<vmem>>, vector<24x384xf32>
    tpu.vector_store %arg3[%c0_42, %c0_43], %70 {strides = array<i32>} : memref<24x384xf32, #tpu.memory_space<vmem>>, vector<24x384xf32>,
    return
  }
}

</mosaic_0001>

<llo_original>
// kernel: input_module_forward.1
$region0: #{input_module_forward.1}
  #allocation0 [shape = 'u32[]', space=smem, size = 0x4, offset = 0x4, fixed_abs, tag = 'smem constant byte address 0x4 - core index']
  #allocation1 [shape = 'u32[144,128]{1,0:T(1,128)}', space=vmem, size = 0x12000, scoped, tag = 'internal scratch']
  #allocation2 [shape = 'f32[256,384]{1,0:T(8,128)}', space=vmem, size = 0x60000, scoped, tag = 'scratch operand']
  %s0 = inlined_call_operand.vmem [shape: s32[24,256], index: 0, kind: input, shape index: {}]
  %s1 = inlined_call_operand.vmem [shape: f32[32,32], index: 1, kind: input, shape index: {}]
  %s2 = inlined_call_operand.vmem [shape: f32[8,32], index: 2, kind: input, shape index: {}]
  %s3 = inlined_call_operand.vmem [shape: f32[24,384], index: 3, kind: output, shape index: {}]
  %s4 = sld [smem:[#allocation0]]
  $region22: #{input_module_forward.1} parent=0
    _
  %s6 = ssub.s32 1, %s4
  %s7 = scalar_select 0, %s6, %s4
  // Predicated region
  $region2: #{input_module_forward.1} parent=0 // pred_check
    _
  $region3: #{input_module_forward.1} parent=0 // pred_check_branch
    %9 = sbr.rel (0) target = $region5
  $region4: #{input_module_forward.1} parent=0 // pred_region
    _
  $region5: #{input_module_forward.1} parent=0 // pred_fallthru
    _
  // Predicated region
  $region6: #{input_module_forward.1} parent=0 // pred_check
    _
  $region7: #{input_module_forward.1} parent=0 // pred_check_branch
    %11 = sbr.rel (0) target = $region9
  $region8: #{input_module_forward.1} parent=0 // pred_region
    _
  $region9: #{input_module_forward.1} parent=0 // pred_fallthru
    _
  // Predicated region
  $region10: #{input_module_forward.1} parent=0 // pred_check
    _
  $region11: #{input_module_forward.1} parent=0 // pred_check_branch
    %13 = sbr.rel (0) target = $region13
  $region12: #{input_module_forward.1} parent=0 // pred_region
    _
  $region13: #{input_module_forward.1} parent=0 // pred_fallthru
    _
  %14 = vst [vmem:[#allocation2] sm:$0xff] 0.0
  %15 = vst [vmem:[#allocation2 + $0x8] sm:$0xff] 0.0
  %16 = vst [vmem:[#allocation2 + $0x10] sm:$0xff] 0.0
  %17 = vst [vmem:[#allocation2 + $0x18] sm:$0xff] 0.0
  %18 = vst [vmem:[#allocation2 + $0x20] sm:$0xff] 0.0
  %19 = vst [vmem:[#allocation2 + $0x28] sm:$0xff] 0.0
  %20 = vst [vmem:[#allocation2 + $0x30] sm:$0xff] 0.0
  %21 = vst [vmem:[#allocation2 + $0x38] sm:$0xff] 0.0
  %22 = vst [vmem:[#allocation2 + $0x40] sm:$0xff] 0.0
  %23 = vst [vmem:[#allocation2 + $0x48] sm:$0xff] 0.0
  %24 = vst [vmem:[#allocation2 + $0x50] sm:$0xff] 0.0
  %25 = vst [vmem:[#allocation2 + $0x58] sm:$0xff] 0.0
  %26 = vst [vmem:[#allocation2 + $0x60] sm:$0xff] 0.0
  %27 = vst [vmem:[#allocation2 + $0x68] sm:$0xff] 0.0
  %28 = vst [vmem:[#allocation2 + $0x70] sm:$0xff] 0.0
  %29 = vst [vmem:[#allocation2 + $0x78] sm:$0xff] 0.0
  %30 = vst [vmem:[#allocation2 + $0x80] sm:$0xff] 0.0
  %31 = vst [vmem:[#allocation2 + $0x88] sm:$0xff] 0.0
  %32 = vst [vmem:[#allocation2 + $0x90] sm:$0xff] 0.0
  %33 = vst [vmem:[#allocation2 + $0x98] sm:$0xff] 0.0
  %34 = vst [vmem:[#allocation2 + $0xa0] sm:$0xff] 0.0
  %35 = vst [vmem:[#allocation2 + $0xa8] sm:$0xff] 0.0
  %36 = vst [vmem:[#allocation2 + $0xb0] sm:$0xff] 0.0
  %37 = vst [vmem:[#allocation2 + $0xb8] sm:$0xff] 0.0
  %38 = vst [vmem:[#allocation2 + $0xc0] sm:$0xff] 0.0
  %39 = vst [vmem:[#allocation2 + $0xc8] sm:$0xff] 0.0
  %40 = vst [vmem:[#allocation2 + $0xd0] sm:$0xff] 0.0
  %41 = vst [vmem:[#allocation2 + $0xd8] sm:$0xff] 0.0
  %42 = vst [vmem:[#allocation2 + $0xe0] sm:$0xff] 0.0
  %43 = vst [vmem:[#allocation2 + $0xe8] sm:$0xff] 0.0
  %44 = vst [vmem:[#allocation2 + $0xf0] sm:$0xff] 0.0
  %45 = vst [vmem:[#allocation2 + $0xf8] sm:$0xff] 0.0
  %46 = vst [vmem:[#allocation2 + $0x100] sm:$0xff] 0.0
  %47 = vst [vmem:[#allocation2 + $0x108] sm:$0xff] 0.0
  %48 = vst [vmem:[#allocation2 + $0x110] sm:$0xff] 0.0
  %49 = vst [vmem:[#allocation2 + $0x118] sm:$0xff] 0.0
  %50 = vst [vmem:[#allocation2 + $0x120] sm:$0xff] 0.0
  %51 = vst [vmem:[#allocation2 + $0x128] sm:$0xff] 0.0
  %52 = vst [vmem:[#allocation2 + $0x130] sm:$0xff] 0.0
  %53 = vst [vmem:[#allocation2 + $0x138] sm:$0xff] 0.0
  %54 = vst [vmem:[#allocation2 + $0x140] sm:$0xff] 0.0
  %55 = vst [vmem:[#allocation2 + $0x148] sm:$0xff] 0.0
  %56 = vst [vmem:[#allocation2 + $0x150] sm:$0xff] 0.0
  %57 = vst [vmem:[#allocation2 + $0x158] sm:$0xff] 0.0
  %58 = vst [vmem:[#allocation2 + $0x160] sm:$0xff] 0.0
  %59 = vst [vmem:[#allocation2 + $0x168] sm:$0xff] 0.0
  %60 = vst [vmem:[#allocation2 + $0x170] sm:$0xff] 0.0
  %61 = vst [vmem:[#allocation2 + $0x178] sm:$0xff] 0.0
  %62 = vst [vmem:[#allocation2 + $0x180] sm:$0xff] 0.0
  %63 = vst [vmem:[#allocation2 + $0x188] sm:$0xff] 0.0
  %64 = vst [vmem:[#allocation2 + $0x190] sm:$0xff] 0.0
  %65 = vst [vmem:[#allocation2 + $0x198] sm:$0xff] 0.0
  %66 = vst [vmem:[#allocation2 + $0x1a0] sm:$0xff] 0.0
  %67 = vst [vmem:[#allocation2 + $0x1a8] sm:$0xff] 0.0
  %68 = vst [vmem:[#allocation2 + $0x1b0] sm:$0xff] 0.0
  %69 = vst [vmem:[#allocation2 + $0x1b8] sm:$0xff] 0.0
  %70 = vst [vmem:[#allocation2 + $0x1c0] sm:$0xff] 0.0
  %71 = vst [vmem:[#allocation2 + $0x1c8] sm:$0xff] 0.0
  %72 = vst [vmem:[#allocation2 + $0x1d0] sm:$0xff] 0.0
  %73 = vst [vmem:[#allocation2 + $0x1d8] sm:$0xff] 0.0
  %74 = vst [vmem:[#allocation2 + $0x1e0] sm:$0xff] 0.0
  %75 = vst [vmem:[#allocation2 + $0x1e8] sm:$0xff] 0.0
  %76 = vst [vmem:[#allocation2 + $0x1f0] sm:$0xff] 0.0
  %77 = vst [vmem:[#allocation2 + $0x1f8] sm:$0xff] 0.0
  %78 = vst [vmem:[#allocation2 + $0x200] sm:$0xff] 0.0
  %79 = vst [vmem:[#allocation2 + $0x208] sm:$0xff] 0.0
  %80 = vst [vmem:[#allocation2 + $0x210] sm:$0xff] 0.0
  %81 = vst [vmem:[#allocation2 + $0x218] sm:$0xff] 0.0
  %82 = vst [vmem:[#allocation2 + $0x220] sm:$0xff] 0.0
  %83 = vst [vmem:[#allocation2 + $0x228] sm:$0xff] 0.0
  %84 = vst [vmem:[#allocation2 + $0x230] sm:$0xff] 0.0
  %85 = vst [vmem:[#allocation2 + $0x238] sm:$0xff] 0.0
  %86 = vst [vmem:[#allocation2 + $0x240] sm:$0xff] 0.0
  %87 = vst [vmem:[#allocation2 + $0x248] sm:$0xff] 0.0
  %88 = vst [vmem:[#allocation2 + $0x250] sm:$0xff] 0.0
  %89 = vst [vmem:[#allocation2 + $0x258] sm:$0xff] 0.0
  %90 = vst [vmem:[#allocation2 + $0x260] sm:$0xff] 0.0
  %91 = vst [vmem:[#allocation2 + $0x268] sm:$0xff] 0.0
  %92 = vst [vmem:[#allocation2 + $0x270] sm:$0xff] 0.0
  %93 = vst [vmem:[#allocation2 + $0x278] sm:$0xff] 0.0
  %94 = vst [vmem:[#allocation2 + $0x280] sm:$0xff] 0.0
  %95 = vst [vmem:[#allocation2 + $0x288] sm:$0xff] 0.0
  %96 = vst [vmem:[#allocation2 + $0x290] sm:$0xff] 0.0
  %97 = vst [vmem:[#allocation2 + $0x298] sm:$0xff] 0.0
  %98 = vst [vmem:[#allocation2 + $0x2a0] sm:$0xff] 0.0
  %99 = vst [vmem:[#allocation2 + $0x2a8] sm:$0xff] 0.0
  %100 = vst [vmem:[#allocation2 + $0x2b0] sm:$0xff] 0.0
  %101 = vst [vmem:[#allocation2 + $0x2b8] sm:$0xff] 0.0
  %102 = vst [vmem:[#allocation2 + $0x2c0] sm:$0xff] 0.0
  %103 = vst [vmem:[#allocation2 + $0x2c8] sm:$0xff] 0.0
  %104 = vst [vmem:[#allocation2 + $0x2d0] sm:$0xff] 0.0
  %105 = vst [vmem:[#allocation2 + $0x2d8] sm:$0xff] 0.0
  %106 = vst [vmem:[#allocation2 + $0x2e0] sm:$0xff] 0.0
  %107 = vst [vmem:[#allocation2 + $0x2e8] sm:$0xff] 0.0
  %108 = vst [vmem:[#allocation2 + $0x2f0] sm:$0xff] 0.0
  %109 = vst [vmem:[#allocation2 + $0x2f8] sm:$0xff] 0.0
  %v110 = vld [vmem:[%s1] sm:$0xff]
  %v111 = vld [vmem:[%s1 + $0x8] sm:$0xff]
  %v112 = vld [vmem:[%s1 + $0x10] sm:$0xff]
  %v113 = vld [vmem:[%s1 + $0x18] sm:$0xff]
  %v114 = vlaneseq
  %v115 = vshrl.u32 %v114, 7
  %v116 = vadd.s32 %v115, 8
  %v117 = vadd.s32 %v115, 16
  %v118 = vadd.s32 %v115, 24
  %vm119 = vcmp.eq.s32.totalorder %v115, 0
  %vm120 = vcmp.eq.s32.totalorder %v116, 0
  %vm121 = vcmp.eq.s32.totalorder %v117, 0
  %vm122 = vcmp.eq.s32.totalorder %v118, 0
  %v123 = vsel %vm119, 0.0, %v110
  %v124 = vsel %vm120, 0.0, %v111
  %v125 = vsel %vm121, 0.0, %v112
  %v126 = vsel %vm122, 0.0, %v113
  %v127 = vld [vmem:[%s2] sm:$0x1]
  %v128 = vlaneseq
  %v129 = vshrl.u32 %v128, 7
  %v130 = vsub.s32 0, %v129
  %v131 = vrot.slane %v127, %v130
  %v132 = vmul.f32 %v110, %v131
  %v133 = vmul.f32 %v111, %v131
  %v134 = vmul.f32 %v112, %v131
  %v135 = vmul.f32 %v113, %v131
  %vm136 = vcmask 261120
  %137 = vst.msk [vmem:[#allocation2] sm:$0xff] %vm136, %v132
  %138 = vst.msk [vmem:[#allocation2 + $0x18] sm:$0xff] %vm136, %v133
  %139 = vst.msk [vmem:[#allocation2 + $0x30] sm:$0xff] %vm136, %v134
  %140 = vst.msk [vmem:[#allocation2 + $0x48] sm:$0xff] %vm136, %v135
  %v141 = vmul.f32 %v123, %v131
  %v142 = vmul.f32 %v124, %v131
  %v143 = vmul.f32 %v125, %v131
  %v144 = vmul.f32 %v126, %v131
  %145 = vst.msk [vmem:[#allocation2 + $0x10] sm:$0xff] %vm136, %v141
  %146 = vst.msk [vmem:[#allocation2 + $0x28] sm:$0xff] %vm136, %v142
  %147 = vst.msk [vmem:[#allocation2 + $0x40] sm:$0xff] %vm136, %v143
  %148 = vst.msk [vmem:[#allocation2 + $0x58] sm:$0xff] %vm136, %v144
  %v149 = vld [vmem:[%s2 + $0x1] sm:$0x1]
  %v150 = vlaneseq
  %v151 = vshrl.u32 %v150, 7
  %v152 = vsub.s32 0, %v151
  %v153 = vrot.slane %v149, %v152
  %v154 = vmul.f32 %v110, %v153
  %v155 = vmul.f32 %v111, %v153
  %v156 = vmul.f32 %v112, %v153
  %v157 = vmul.f32 %v113, %v153
  %162 = vrot.lane.b32.xlu0 %v154, 32
  %v163 = vpop.permute.xlu0 %162
  %164 = vrot.lane.b32.xlu0 %v155, 32
  %v165 = vpop.permute.xlu0 %164
  %166 = vrot.lane.b32.xlu0 %v156, 32
  %v167 = vpop.permute.xlu0 %166
  %168 = vrot.lane.b32.xlu0 %v157, 32
  %v169 = vpop.permute.xlu0 %168
  %vm174 = vcmask 523520
  %175 = vst.msk [vmem:[#allocation2 + $0x60] sm:$0xff] %vm174, %v163
  %176 = vst.msk [vmem:[#allocation2 + $0x78] sm:$0xff] %vm174, %v165
  %177 = vst.msk [vmem:[#allocation2 + $0x90] sm:$0xff] %vm174, %v167
  %178 = vst.msk [vmem:[#allocation2 + $0xa8] sm:$0xff] %vm174, %v169
  %v179 = vmul.f32 %v123, %v153
  %v180 = vmul.f32 %v124, %v153
  %v181 = vmul.f32 %v125, %v153
  %v182 = vmul.f32 %v126, %v153
  %183 = vst.msk [vmem:[#allocation2 + $0x70] sm:$0xff] %vm136, %v179
  %184 = vst.msk [vmem:[#allocation2 + $0x88] sm:$0xff] %vm136, %v180
  %185 = vst.msk [vmem:[#allocation2 + $0xa0] sm:$0xff] %vm136, %v181
  %186 = vst.msk [vmem:[#allocation2 + $0xb8] sm:$0xff] %vm136, %v182
  %v187 = vld [vmem:[%s2 + $0x2] sm:$0x1]
  %v188 = vlaneseq
  %v189 = vshrl.u32 %v188, 7
  %v190 = vsub.s32 0, %v189
  %v191 = vrot.slane %v187, %v190
  %v192 = vmul.f32 %v110, %v191
  %v193 = vmul.f32 %v111, %v191
  %v194 = vmul.f32 %v112, %v191
  %v195 = vmul.f32 %v113, %v191
  %200 = vrot.lane.b32.xlu0 %v192, 64
  %v201 = vpop.permute.xlu0 %200
  %202 = vrot.lane.b32.xlu0 %v193, 64
  %v203 = vpop.permute.xlu0 %202
  %204 = vrot.lane.b32.xlu0 %v194, 64
  %v205 = vpop.permute.xlu0 %204
  %206 = vrot.lane.b32.xlu0 %v195, 64
  %v207 = vpop.permute.xlu0 %206
  %vm212 = vcmask 785920
  %213 = vst.msk [vmem:[#allocation2 + $0xc0] sm:$0xff] %vm212, %v201
  %214 = vst.msk [vmem:[#allocation2 + $0xd8] sm:$0xff] %vm212, %v203
  %215 = vst.msk [vmem:[#allocation2 + $0xf0] sm:$0xff] %vm212, %v205
  %216 = vst.msk [vmem:[#allocation2 + $0x108] sm:$0xff] %vm212, %v207
  %v217 = vmul.f32 %v123, %v191
  %v218 = vmul.f32 %v124, %v191
  %v219 = vmul.f32 %v125, %v191
  %v220 = vmul.f32 %v126, %v191
  %221 = vst.msk [vmem:[#allocation2 + $0xd0] sm:$0xff] %vm136, %v217
  %222 = vst.msk [vmem:[#allocation2 + $0xe8] sm:$0xff] %vm136, %v218
  %223 = vst.msk [vmem:[#allocation2 + $0x100] sm:$0xff] %vm136, %v219
  %224 = vst.msk [vmem:[#allocation2 + $0x118] sm:$0xff] %vm136, %v220
  %v225 = vld [vmem:[%s2 + $0x3] sm:$0x1]
  %v226 = vlaneseq
  %v227 = vshrl.u32 %v226, 7
  %v228 = vsub.s32 0, %v227
  %v229 = vrot.slane %v225, %v228
  %v230 = vmul.f32 %v110, %v229
  %v231 = vmul.f32 %v111, %v229
  %v232 = vmul.f32 %v112, %v229
  %v233 = vmul.f32 %v113, %v229
  %238 = vrot.lane.b32.xlu0 %v230, 96
  %v239 = vpop.permute.xlu0 %238
  %240 = vrot.lane.b32.xlu0 %v231, 96
  %v241 = vpop.permute.xlu0 %240
  %242 = vrot.lane.b32.xlu0 %v232, 96
  %v243 = vpop.permute.xlu0 %242
  %244 = vrot.lane.b32.xlu0 %v233, 96
  %v245 = vpop.permute.xlu0 %244
  %vm250 = vcmask 1048320
  %251 = vst.msk [vmem:[#allocation2 + $0x120] sm:$0xff] %vm250, %v239
  %252 = vst.msk [vmem:[#allocation2 + $0x138] sm:$0xff] %vm250, %v241
  %253 = vst.msk [vmem:[#allocation2 + $0x150] sm:$0xff] %vm250, %v243
  %254 = vst.msk [vmem:[#allocation2 + $0x168] sm:$0xff] %vm250, %v245
  %v255 = vmul.f32 %v123, %v229
  %v256 = vmul.f32 %v124, %v229
  %v257 = vmul.f32 %v125, %v229
  %v258 = vmul.f32 %v126, %v229
  %259 = vst.msk [vmem:[#allocation2 + $0x130] sm:$0xff] %vm136, %v255
  %260 = vst.msk [vmem:[#allocation2 + $0x148] sm:$0xff] %vm136, %v256
  %261 = vst.msk [vmem:[#allocation2 + $0x160] sm:$0xff] %vm136, %v257
  %262 = vst.msk [vmem:[#allocation2 + $0x178] sm:$0xff] %vm136, %v258
  %v263 = vld [vmem:[%s2 + $0x4] sm:$0x1]
  %v264 = vlaneseq
  %v265 = vshrl.u32 %v264, 7
  %v266 = vsub.s32 0, %v265
  %v267 = vrot.slane %v263, %v266
  %v268 = vmul.f32 %v110, %v267
  %v269 = vmul.f32 %v111, %v267
  %v270 = vmul.f32 %v112, %v267
  %v271 = vmul.f32 %v113, %v267
  %272 = vst.msk [vmem:[#allocation2 + $0x188] sm:$0xff] %vm136, %v268
  %273 = vst.msk [vmem:[#allocation2 + $0x1a0] sm:$0xff] %vm136, %v269
  %274 = vst.msk [vmem:[#allocation2 + $0x1b8] sm:$0xff] %vm136, %v270
  %275 = vst.msk [vmem:[#allocation2 + $0x1d0] sm:$0xff] %vm136, %v271
  %v276 = vmul.f32 %v123, %v267
  %v277 = vmul.f32 %v124, %v267
  %v278 = vmul.f32 %v125, %v267
  %v279 = vmul.f32 %v126, %v267
  %280 = vst.msk [vmem:[#allocation2 + $0x190] sm:$0xff] %vm136, %v276
  %281 = vst.msk [vmem:[#allocation2 + $0x1a8] sm:$0xff] %vm136, %v277
  %282 = vst.msk [vmem:[#allocation2 + $0x1c0] sm:$0xff] %vm136, %v278
  %283 = vst.msk [vmem:[#allocation2 + $0x1d8] sm:$0xff] %vm136, %v279
  %v284 = vld [vmem:[%s2 + $0x5] sm:$0x1]
  %v285 = vlaneseq
  %v286 = vshrl.u32 %v285, 7
  %v287 = vsub.s32 0, %v286
  %v288 = vrot.slane %v284, %v287
  %v289 = vmul.f32 %v110, %v288
  %v290 = vmul.f32 %v111, %v288
  %v291 = vmul.f32 %v112, %v288
  %v292 = vmul.f32 %v113, %v288
  %297 = vrot.lane.b32.xlu0 %v289, 32
  %v298 = vpop.permute.xlu0 %297
  %299 = vrot.lane.b32.xlu0 %v290, 32
  %v300 = vpop.permute.xlu0 %299
  %301 = vrot.lane.b32.xlu0 %v291, 32
  %v302 = vpop.permute.xlu0 %301
  %303 = vrot.lane.b32.xlu0 %v292, 32
  %v304 = vpop.permute.xlu0 %303
  %309 = vst.msk [vmem:[#allocation2 + $0x1e8] sm:$0xff] %vm174, %v298
  %310 = vst.msk [vmem:[#allocation2 + $0x200] sm:$0xff] %vm174, %v300
  %311 = vst.msk [vmem:[#allocation2 + $0x218] sm:$0xff] %vm174, %v302
  %312 = vst.msk [vmem:[#allocation2 + $0x230] sm:$0xff] %vm174, %v304
  %v313 = vmul.f32 %v123, %v288
  %v314 = vmul.f32 %v124, %v288
  %v315 = vmul.f32 %v125, %v288
  %v316 = vmul.f32 %v126, %v288
  %317 = vst.msk [vmem:[#allocation2 + $0x1f0] sm:$0xff] %vm136, %v313
  %318 = vst.msk [vmem:[#allocation2 + $0x208] sm:$0xff] %vm136, %v314
  %319 = vst.msk [vmem:[#allocation2 + $0x220] sm:$0xff] %vm136, %v315
  %320 = vst.msk [vmem:[#allocation2 + $0x238] sm:$0xff] %vm136, %v316
  %v321 = vld [vmem:[%s2 + $0x6] sm:$0x1]
  %v322 = vlaneseq
  %v323 = vshrl.u32 %v322, 7
  %v324 = vsub.s32 0, %v323
  %v325 = vrot.slane %v321, %v324
  %v326 = vmul.f32 %v110, %v325
  %v327 = vmul.f32 %v111, %v325
  %v328 = vmul.f32 %v112, %v325
  %v329 = vmul.f32 %v113, %v325
  %334 = vrot.lane.b32.xlu0 %v326, 64
  %v335 = vpop.permute.xlu0 %334
  %336 = vrot.lane.b32.xlu0 %v327, 64
  %v337 = vpop.permute.xlu0 %336
  %338 = vrot.lane.b32.xlu0 %v328, 64
  %v339 = vpop.permute.xlu0 %338
  %340 = vrot.lane.b32.xlu0 %v329, 64
  %v341 = vpop.permute.xlu0 %340
  %346 = vst.msk [vmem:[#allocation2 + $0x248] sm:$0xff] %vm212, %v335
  %347 = vst.msk [vmem:[#allocation2 + $0x260] sm:$0xff] %vm212, %v337
  %348 = vst.msk [vmem:[#allocation2 + $0x278] sm:$0xff] %vm212, %v339
  %349 = vst.msk [vmem:[#allocation2 + $0x290] sm:$0xff] %vm212, %v341
  %v350 = vmul.f32 %v123, %v325
  %v351 = vmul.f32 %v124, %v325
  %v352 = vmul.f32 %v125, %v325
  %v353 = vmul.f32 %v126, %v325
  %354 = vst.msk [vmem:[#allocation2 + $0x250] sm:$0xff] %vm136, %v350
  %355 = vst.msk [vmem:[#allocation2 + $0x268] sm:$0xff] %vm136, %v351
  %356 = vst.msk [vmem:[#allocation2 + $0x280] sm:$0xff] %vm136, %v352
  %357 = vst.msk [vmem:[#allocation2 + $0x298] sm:$0xff] %vm136, %v353
  %v358 = vld [vmem:[%s2 + $0x7] sm:$0x1]
  %v359 = vlaneseq
  %v360 = vshrl.u32 %v359, 7
  %v361 = vsub.s32 0, %v360
  %v362 = vrot.slane %v358, %v361
  %v363 = vmul.f32 %v110, %v362
  %v364 = vmul.f32 %v111, %v362
  %v365 = vmul.f32 %v112, %v362
  %v366 = vmul.f32 %v113, %v362
  %371 = vrot.lane.b32.xlu0 %v363, 96
  %v372 = vpop.permute.xlu0 %371
  %373 = vrot.lane.b32.xlu0 %v364, 96
  %v374 = vpop.permute.xlu0 %373
  %375 = vrot.lane.b32.xlu0 %v365, 96
  %v376 = vpop.permute.xlu0 %375
  %377 = vrot.lane.b32.xlu0 %v366, 96
  %v378 = vpop.permute.xlu0 %377
  %383 = vst.msk [vmem:[#allocation2 + $0x2a8] sm:$0xff] %vm250, %v372
  %384 = vst.msk [vmem:[#allocation2 + $0x2c0] sm:$0xff] %vm250, %v374
  %385 = vst.msk [vmem:[#allocation2 + $0x2d8] sm:$0xff] %vm250, %v376
  %386 = vst.msk [vmem:[#allocation2 + $0x2f0] sm:$0xff] %vm250, %v378
  %v387 = vmul.f32 %v123, %v362
  %v388 = vmul.f32 %v124, %v362
  %v389 = vmul.f32 %v125, %v362
  %v390 = vmul.f32 %v126, %v362
  %391 = vst.msk [vmem:[#allocation2 + $0x2b0] sm:$0xff] %vm136, %v387
  %392 = vst.msk [vmem:[#allocation2 + $0x2c8] sm:$0xff] %vm136, %v388
  %393 = vst.msk [vmem:[#allocation2 + $0x2e0] sm:$0xff] %vm136, %v389
  %394 = vst.msk [vmem:[#allocation2 + $0x2f8] sm:$0xff] %vm136, %v390
  %v395 = vlaneseq
  %v396 = vand.u32 %v395, 127
  %v397 = vadd.s32 %v396, 128
  %v398 = vld [vmem:[%s0] sm:$0xff]
  %v399 = vld [vmem:[%s0 + $0x8] sm:$0xff]
  %v400 = vld [vmem:[%s0 + $0x10] sm:$0xff]
  %v401 = vld [vmem:[%s0 + $0x18] sm:$0xff]
  %v402 = vld [vmem:[%s0 + $0x20] sm:$0xff]
  %v403 = vld [vmem:[%s0 + $0x28] sm:$0xff]
  %vm404 = vcmp.eq.s32.totalorder %v396, %v398
  %vm405 = vcmp.eq.s32.totalorder %v397, %v399
  %vm406 = vcmp.eq.s32.totalorder %v396, %v400
  %vm407 = vcmp.eq.s32.totalorder %v397, %v401
  %vm408 = vcmp.eq.s32.totalorder %v396, %v402
  %vm409 = vcmp.eq.s32.totalorder %v397, %v403
  %v410 = vsel %vm404, 1, 0
  %v411 = vsel %vm405, 1, 0
  %v412 = vsel %vm406, 1, 0
  %v413 = vsel %vm407, 1, 0
  %v414 = vsel %vm408, 1, 0
  %v415 = vsel %vm409, 1, 0
  %v416 = vcvt.s32.f32 %v410
  %v417 = vcvt.s32.f32 %v411
  %v418 = vcvt.s32.f32 %v412
  %v419 = vcvt.s32.f32 %v413
  %v420 = vcvt.s32.f32 %v414
  %v421 = vcvt.s32.f32 %v415
  %v422 = vld [vmem:[#allocation2] sm:$0xff]
  %v423 = vld [vmem:[#allocation2 + $0x8] sm:$0xff]
  %v424 = vld [vmem:[#allocation2 + $0x10] sm:$0xff]
  %v425 = vld [vmem:[#allocation2 + $0x18] sm:$0xff]
  %v426 = vld [vmem:[#allocation2 + $0x20] sm:$0xff]
  %v427 = vld [vmem:[#allocation2 + $0x28] sm:$0xff]
  %v428 = vld [vmem:[#allocation2 + $0x30] sm:$0xff]
  %v429 = vld [vmem:[#allocation2 + $0x38] sm:$0xff]
  %v430 = vld [vmem:[#allocation2 + $0x40] sm:$0xff]
  %v431 = vld [vmem:[#allocation2 + $0x48] sm:$0xff]
  %v432 = vld [vmem:[#allocation2 + $0x50] sm:$0xff]
  %v433 = vld [vmem:[#allocation2 + $0x58] sm:$0xff]
  %v434 = vld [vmem:[#allocation2 + $0x60] sm:$0xff]
  %v435 = vld [vmem:[#allocation2 + $0x68] sm:$0xff]
  %v436 = vld [vmem:[#allocation2 + $0x70] sm:$0xff]
  %v437 = vld [vmem:[#allocation2 + $0x78] sm:$0xff]
  %v438 = vld [vmem:[#allocation2 + $0x80] sm:$0xff]
  %v439 = vld [vmem:[#allocation2 + $0x88] sm:$0xff]
  %v440 = vld [vmem:[#allocation2 + $0x90] sm:$0xff]
  %v441 = vld [vmem:[#allocation2 + $0x98] sm:$0xff]
  %v442 = vld [vmem:[#allocation2 + $0xa0] sm:$0xff]
  %v443 = vld [vmem:[#allocation2 + $0xa8] sm:$0xff]
  %v444 = vld [vmem:[#allocation2 + $0xb0] sm:$0xff]
  %v445 = vld [vmem:[#allocation2 + $0xb8] sm:$0xff]
  %v446 = vld [vmem:[#allocation2 + $0xc0] sm:$0xff]
  %v447 = vld [vmem:[#allocation2 + $0xc8] sm:$0xff]
  %v448 = vld [vmem:[#allocation2 + $0xd0] sm:$0xff]
  %v449 = vld [vmem:[#allocation2 + $0xd8] sm:$0xff]
  %v450 = vld [vmem:[#allocation2 + $0xe0] sm:$0xff]
  %v451 = vld [vmem:[#allocation2 + $0xe8] sm:$0xff]
  %v452 = vld [vmem:[#allocation2 + $0xf0] sm:$0xff]
  %v453 = vld [vmem:[#allocation2 + $0xf8] sm:$0xff]
  %v454 = vld [vmem:[#allocation2 + $0x100] sm:$0xff]
  %v455 = vld [vmem:[#allocation2 + $0x108] sm:$0xff]
  %v456 = vld [vmem:[#allocation2 + $0x110] sm:$0xff]
  %v457 = vld [vmem:[#allocation2 + $0x118] sm:$0xff]
  %v458 = vld [vmem:[#allocation2 + $0x120] sm:$0xff]
  %v459 = vld [vmem:[#allocation2 + $0x128] sm:$0xff]
  %v460 = vld [vmem:[#allocation2 + $0x130] sm:$0xff]
  %v461 = vld [vmem:[#allocation2 + $0x138] sm:$0xff]
  %v462 = vld [vmem:[#allocation2 + $0x140] sm:$0xff]
  %v463 = vld [vmem:[#allocation2 + $0x148] sm:$0xff]
  %v464 = vld [vmem:[#allocation2 + $0x150] sm:$0xff]
  %v465 = vld [vmem:[#allocation2 + $0x158] sm:$0xff]
  %v466 = vld [vmem:[#allocation2 + $0x160] sm:$0xff]
  %v467 = vld [vmem:[#allocation2 + $0x168] sm:$0xff]
  %v468 = vld [vmem:[#allocation2 + $0x170] sm:$0xff]
  %v469 = vld [vmem:[#allocation2 + $0x178] sm:$0xff]
  %v470 = vld [vmem:[#allocation2 + $0x180] sm:$0xff]
  %v471 = vld [vmem:[#allocation2 + $0x188] sm:$0xff]
  %v472 = vld [vmem:[#allocation2 + $0x190] sm:$0xff]
  %v473 = vld [vmem:[#allocation2 + $0x198] sm:$0xff]
  %v474 = vld [vmem:[#allocation2 + $0x1a0] sm:$0xff]
  %v475 = vld [vmem:[#allocation2 + $0x1a8] sm:$0xff]
  %v476 = vld [vmem:[#allocation2 + $0x1b0] sm:$0xff]
  %v477 = vld [vmem:[#allocation2 + $0x1b8] sm:$0xff]
  %v478 = vld [vmem:[#allocation2 + $0x1c0] sm:$0xff]
  %v479 = vld [vmem:[#allocation2 + $0x1c8] sm:$0xff]
  %v480 = vld [vmem:[#allocation2 + $0x1d0] sm:$0xff]
  %v481 = vld [vmem:[#allocation2 + $0x1d8] sm:$0xff]
  %v482 = vld [vmem:[#allocation2 + $0x1e0] sm:$0xff]
  %v483 = vld [vmem:[#allocation2 + $0x1e8] sm:$0xff]
  %v484 = vld [vmem:[#allocation2 + $0x1f0] sm:$0xff]
  %v485 = vld [vmem:[#allocation2 + $0x1f8] sm:$0xff]
  %v486 = vld [vmem:[#allocation2 + $0x200] sm:$0xff]
  %v487 = vld [vmem:[#allocation2 + $0x208] sm:$0xff]
  %v488 = vld [vmem:[#allocation2 + $0x210] sm:$0xff]
  %v489 = vld [vmem:[#allocation2 + $0x218] sm:$0xff]
  %v490 = vld [vmem:[#allocation2 + $0x220] sm:$0xff]
  %v491 = vld [vmem:[#allocation2 + $0x228] sm:$0xff]
  %v492 = vld [vmem:[#allocation2 + $0x230] sm:$0xff]
  %v493 = vld [vmem:[#allocation2 + $0x238] sm:$0xff]
  %v494 = vld [vmem:[#allocation2 + $0x240] sm:$0xff]
  %v495 = vld [vmem:[#allocation2 + $0x248] sm:$0xff]
  %v496 = vld [vmem:[#allocation2 + $0x250] sm:$0xff]
  %v497 = vld [vmem:[#allocation2 + $0x258] sm:$0xff]
  %v498 = vld [vmem:[#allocation2 + $0x260] sm:$0xff]
  %v499 = vld [vmem:[#allocation2 + $0x268] sm:$0xff]
  %v500 = vld [vmem:[#allocation2 + $0x270] sm:$0xff]
  %v501 = vld [vmem:[#allocation2 + $0x278] sm:$0xff]
  %v502 = vld [vmem:[#allocation2 + $0x280] sm:$0xff]
  %v503 = vld [vmem:[#allocation2 + $0x288] sm:$0xff]
  %v504 = vld [vmem:[#allocation2 + $0x290] sm:$0xff]
  %v505 = vld [vmem:[#allocation2 + $0x298] sm:$0xff]
  %v506 = vld [vmem:[#allocation2 + $0x2a0] sm:$0xff]
  %v507 = vld [vmem:[#allocation2 + $0x2a8] sm:$0xff]
  %v508 = vld [vmem:[#allocation2 + $0x2b0] sm:$0xff]
  %v509 = vld [vmem:[#allocation2 + $0x2b8] sm:$0xff]
  %v510 = vld [vmem:[#allocation2 + $0x2c0] sm:$0xff]
  %v511 = vld [vmem:[#allocation2 + $0x2c8] sm:$0xff]
  %v512 = vld [vmem:[#allocation2 + $0x2d0] sm:$0xff]
  %v513 = vld [vmem:[#allocation2 + $0x2d8] sm:$0xff]
  %v514 = vld [vmem:[#allocation2 + $0x2e0] sm:$0xff]
  %v515 = vld [vmem:[#allocation2 + $0x2e8] sm:$0xff]
  %v516 = vld [vmem:[#allocation2 + $0x2f0] sm:$0xff]
  %v517 = vld [vmem:[#allocation2 + $0x2f8] sm:$0xff]
  %v518 = vand.u32 %v423, 4294901760
  %519 = vmatprep.subr.mxu0 %v518
  %v520 = vand.u32 %v422, 4294901760
  %521 = vmatpush1.msra.mxu0 %v520
  %v522 = vand.u32 %v426, 4294901760
  %523 = vmatprep.subr.mxu0 %v522
  %v524 = vand.u32 %v425, 4294901760
  %525 = vmatpush1.msra.mxu0 %v524
  %v526 = vand.u32 %v429, 4294901760
  %527 = vmatprep.subr.mxu0 %v526
  %v528 = vand.u32 %v428, 4294901760
  %529 = vmatpush1.msra.mxu0 %v528
  %v530 = vand.u32 %v432, 4294901760
  %531 = vmatprep.subr.mxu0 %v530
  %v532 = vand.u32 %v431, 4294901760
  %533 = vmatpush1.msra.mxu0 %v532
  %v534 = vand.u32 %v435, 4294901760
  %535 = vmatprep.subr.mxu0 %v534
  %v536 = vand.u32 %v434, 4294901760
  %537 = vmatpush1.msra.mxu0 %v536
  %v538 = vand.u32 %v438, 4294901760
  %539 = vmatprep.subr.mxu0 %v538
  %v540 = vand.u32 %v437, 4294901760
  %541 = vmatpush1.msra.mxu0 %v540
  %v542 = vand.u32 %v441, 4294901760
  %543 = vmatprep.subr.mxu0 %v542
  %v544 = vand.u32 %v440, 4294901760
  %545 = vmatpush1.msra.mxu0 %v544
  %v546 = vand.u32 %v444, 4294901760
  %547 = vmatprep.subr.mxu0 %v546
  %v548 = vand.u32 %v443, 4294901760
  %549 = vmatpush1.msra.mxu0 %v548
  %v550 = vand.u32 %v447, 4294901760
  %551 = vmatprep.subr.mxu0 %v550
  %v552 = vand.u32 %v446, 4294901760
  %553 = vmatpush1.msra.mxu0 %v552
  %v554 = vand.u32 %v450, 4294901760
  %555 = vmatprep.subr.mxu0 %v554
  %v556 = vand.u32 %v449, 4294901760
  %557 = vmatpush1.msra.mxu0 %v556
  %v558 = vand.u32 %v453, 4294901760
  %559 = vmatprep.subr.mxu0 %v558
  %v560 = vand.u32 %v452, 4294901760
  %561 = vmatpush1.msra.mxu0 %v560
  %v562 = vand.u32 %v456, 4294901760
  %563 = vmatprep.subr.mxu0 %v562
  %v564 = vand.u32 %v455, 4294901760
  %565 = vmatpush1.msra.mxu0 %v564
  %v566 = vand.u32 %v459, 4294901760
  %567 = vmatprep.subr.mxu0 %v566
  %v568 = vand.u32 %v458, 4294901760
  %569 = vmatpush1.msra.mxu0 %v568
  %v570 = vand.u32 %v462, 4294901760
  %571 = vmatprep.subr.mxu0 %v570
  %v572 = vand.u32 %v461, 4294901760
  %573 = vmatpush1.msra.mxu0 %v572
  %v574 = vand.u32 %v465, 4294901760
  %575 = vmatprep.subr.mxu0 %v574
  %v576 = vand.u32 %v464, 4294901760
  %577 = vmatpush1.msra.mxu0 %v576
  %v578 = vand.u32 %v468, 4294901760
  %579 = vmatprep.subr.mxu0 %v578
  %v580 = vand.u32 %v467, 4294901760
  %581 = vmatpush1.msra.mxu0 %v580
  %v582 = vand.u32 %v471, 4294901760
  %583 = vmatprep.subr.mxu0 %v582
  %v584 = vand.u32 %v470, 4294901760
  %585 = vmatpush1.msra.mxu0 %v584
  %v586 = vand.u32 %v474, 4294901760
  %587 = vmatprep.subr.mxu0 %v586
  %v588 = vand.u32 %v473, 4294901760
  %589 = vmatpush1.msra.mxu0 %v588
  %v590 = vand.u32 %v477, 4294901760
  %591 = vmatprep.subr.mxu0 %v590
  %v592 = vand.u32 %v476, 4294901760
  %593 = vmatpush1.msra.mxu0 %v592
  %v594 = vand.u32 %v480, 4294901760
  %595 = vmatprep.subr.mxu0 %v594
  %v596 = vand.u32 %v479, 4294901760
  %597 = vmatpush1.msra.mxu0 %v596
  %v598 = vand.u32 %v483, 4294901760
  %599 = vmatprep.subr.mxu0 %v598
  %v600 = vand.u32 %v482, 4294901760
  %601 = vmatpush1.msra.mxu0 %v600
  %v602 = vand.u32 %v486, 4294901760
  %603 = vmatprep.subr.mxu0 %v602
  %v604 = vand.u32 %v485, 4294901760
  %605 = vmatpush1.msra.mxu0 %v604
  %v606 = vand.u32 %v489, 4294901760
  %607 = vmatprep.subr.mxu0 %v606
  %v608 = vand.u32 %v488, 4294901760
  %609 = vmatpush1.msra.mxu0 %v608
  %v610 = vand.u32 %v492, 4294901760
  %611 = vmatprep.subr.mxu0 %v610
  %v612 = vand.u32 %v491, 4294901760
  %613 = vmatpush1.msra.mxu0 %v612
  %v614 = vand.u32 %v495, 4294901760
  %615 = vmatprep.subr.mxu0 %v614
  %v616 = vand.u32 %v494, 4294901760
  %617 = vmatpush1.msra.mxu0 %v616
  %v618 = vand.u32 %v498, 4294901760
  %619 = vmatprep.subr.mxu0 %v618
  %v620 = vand.u32 %v497, 4294901760
  %621 = vmatpush1.msra.mxu0 %v620
  %v622 = vand.u32 %v501, 4294901760
  %623 = vmatprep.subr.mxu0 %v622
  %v624 = vand.u32 %v500, 4294901760
  %625 = vmatpush1.msra.mxu0 %v624
  %v626 = vand.u32 %v504, 4294901760
  %627 = vmatprep.subr.mxu0 %v626
  %v628 = vand.u32 %v503, 4294901760
  %629 = vmatpush1.msra.mxu0 %v628
  %v630 = vand.u32 %v507, 4294901760
  %631 = vmatprep.subr.mxu0 %v630
  %v632 = vand.u32 %v506, 4294901760
  %633 = vmatpush1.msra.mxu0 %v632
  %v634 = vand.u32 %v510, 4294901760
  %635 = vmatprep.subr.mxu0 %v634
  %v636 = vand.u32 %v509, 4294901760
  %637 = vmatpush1.msra.mxu0 %v636
  %v638 = vand.u32 %v513, 4294901760
  %639 = vmatprep.subr.mxu0 %v638
  %v640 = vand.u32 %v512, 4294901760
  %641 = vmatpush1.msra.mxu0 %v640
  %v642 = vand.u32 %v516, 4294901760
  %643 = vmatprep.subr.mxu0 %v642
  %v644 = vand.u32 %v515, 4294901760
  %645 = vmatpush1.msra.mxu0 %v644
  %v646 = vand.u32 %v417, 4294901760
  %v647 = vsub.f32 %v417, %v646
  %v648 = vand.u32 %v647, 4294901760
  %v649 = vsub.f32 %v647, %v648
  %v650 = vand.u32 %v649, 4294901760
  %651 = vmatprep.mubr.f32.mxu0 %v650
  %v652 = vand.u32 %v416, 4294901760
  %v653 = vsub.f32 %v416, %v652
  %v654 = vand.u32 %v653, 4294901760
  %v655 = vsub.f32 %v653, %v654
  %v656 = vand.u32 %v655, 4294901760
  %657 = vmatmul.mubr.f32.gmra.mrb[0].mxu0 %v656
  %v658 = vpop.f32.mrb[0].mxu0
  %v659 = vadd.f32 0.0, %v658
  %v660 = vpop.f32.mrb[0].mxu0
  %v661 = vadd.f32 0.0, %v660
  %v662 = vand.u32 %v419, 4294901760
  %v663 = vsub.f32 %v419, %v662
  %v664 = vand.u32 %v663, 4294901760
  %v665 = vsub.f32 %v663, %v664
  %v666 = vand.u32 %v665, 4294901760
  %667 = vmatprep.mubr.f32.mxu0 %v666
  %v668 = vand.u32 %v418, 4294901760
  %v669 = vsub.f32 %v418, %v668
  %v670 = vand.u32 %v669, 4294901760
  %v671 = vsub.f32 %v669, %v670
  %v672 = vand.u32 %v671, 4294901760
  %673 = vmatmul.mubr.f32.gmra.mrb[0].mxu0 %v672
  %v674 = vpop.f32.mrb[0].mxu0
  %v675 = vadd.f32 0.0, %v674
  %v676 = vpop.f32.mrb[0].mxu0
  %v677 = vadd.f32 0.0, %v676
  %v678 = vand.u32 %v421, 4294901760
  %v679 = vsub.f32 %v421, %v678
  %v680 = vand.u32 %v679, 4294901760
  %v681 = vsub.f32 %v679, %v680
  %v682 = vand.u32 %v681, 4294901760
  %683 = vmatprep.mubr.f32.mxu0 %v682
  %v684 = vand.u32 %v420, 4294901760
  %v685 = vsub.f32 %v420, %v684
  %v686 = vand.u32 %v685, 4294901760
  %v687 = vsub.f32 %v685, %v686
  %v688 = vand.u32 %v687, 4294901760
  %689 = vmatmul.mubr.f32.gmra.mrb[0].mxu0 %v688
  %v690 = vpop.f32.mrb[0].mxu0
  %v691 = vadd.f32 0.0, %v690
  %v692 = vpop.f32.mrb[0].mxu0
  %v693 = vadd.f32 0.0, %v692
  %694 = vdwg.mxu0
  %v695 = vand.u32 %v423, 4294901760
  %v696 = vsub.f32 %v423, %v695
  %v697 = vand.u32 %v696, 4294901760
  %v698 = vsub.f32 %v696, %v697
  %v699 = vand.u32 %v698, 4294901760
  %700 = vmatprep.subr.mxu0 %v699
  %v701 = vand.u32 %v422, 4294901760
  %v702 = vsub.f32 %v422, %v701
  %v703 = vand.u32 %v702, 4294901760
  %v704 = vsub.f32 %v702, %v703
  %v705 = vand.u32 %v704, 4294901760
  %706 = vmatpush1.msra.mxu0 %v705
  %v707 = vand.u32 %v426, 4294901760
  %v708 = vsub.f32 %v426, %v707
  %v709 = vand.u32 %v708, 4294901760
  %v710 = vsub.f32 %v708, %v709
  %v711 = vand.u32 %v710, 4294901760
  %712 = vmatprep.subr.mxu0 %v711
  %v713 = vand.u32 %v425, 4294901760
  %v714 = vsub.f32 %v425, %v713
  %v715 = vand.u32 %v714, 4294901760
  %v716 = vsub.f32 %v714, %v715
  %v717 = vand.u32 %v716, 4294901760
  %718 = vmatpush1.msra.mxu0 %v717
  %v719 = vand.u32 %v429, 4294901760
  %v720 = vsub.f32 %v429, %v719
  %v721 = vand.u32 %v720, 4294901760
  %v722 = vsub.f32 %v720, %v721
  %v723 = vand.u32 %v722, 4294901760
  %724 = vmatprep.subr.mxu0 %v723
  %v725 = vand.u32 %v428, 4294901760
  %v726 = vsub.f32 %v428, %v725
  %v727 = vand.u32 %v726, 4294901760
  %v728 = vsub.f32 %v726, %v727
  %v729 = vand.u32 %v728, 4294901760
  %730 = vmatpush1.msra.mxu0 %v729
  %v731 = vand.u32 %v432, 4294901760
  %v732 = vsub.f32 %v432, %v731
  %v733 = vand.u32 %v732, 4294901760
  %v734 = vsub.f32 %v732, %v733
  %v735 = vand.u32 %v734, 4294901760
  %736 = vmatprep.subr.mxu0 %v735
  %v737 = vand.u32 %v431, 4294901760
  %v738 = vsub.f32 %v431, %v737
  %v739 = vand.u32 %v738, 4294901760
  %v740 = vsub.f32 %v738, %v739
  %v741 = vand.u32 %v740, 4294901760
  %742 = vmatpush1.msra.mxu0 %v741
  %v743 = vand.u32 %v435, 4294901760
  %v744 = vsub.f32 %v435, %v743
  %v745 = vand.u32 %v744, 4294901760
  %v746 = vsub.f32 %v744, %v745
  %v747 = vand.u32 %v746, 4294901760
  %748 = vmatprep.subr.mxu0 %v747
  %v749 = vand.u32 %v434, 4294901760
  %v750 = vsub.f32 %v434, %v749
  %v751 = vand.u32 %v750, 4294901760
  %v752 = vsub.f32 %v750, %v751
  %v753 = vand.u32 %v752, 4294901760
  %754 = vmatpush1.msra.mxu0 %v753
  %v755 = vand.u32 %v438, 4294901760
  %v756 = vsub.f32 %v438, %v755
  %v757 = vand.u32 %v756, 4294901760
  %v758 = vsub.f32 %v756, %v757
  %v759 = vand.u32 %v758, 4294901760
  %760 = vmatprep.subr.mxu0 %v759
  %v761 = vand.u32 %v437, 4294901760
  %v762 = vsub.f32 %v437, %v761
  %v763 = vand.u32 %v762, 4294901760
  %v764 = vsub.f32 %v762, %v763
  %v765 = vand.u32 %v764, 4294901760
  %766 = vmatpush1.msra.mxu0 %v765
  %v767 = vand.u32 %v441, 4294901760
  %v768 = vsub.f32 %v441, %v767
  %v769 = vand.u32 %v768, 4294901760
  %v770 = vsub.f32 %v768, %v769
  %v771 = vand.u32 %v770, 4294901760
  %772 = vmatprep.subr.mxu0 %v771
  %v773 = vand.u32 %v440, 4294901760
  %v774 = vsub.f32 %v440, %v773
  %v775 = vand.u32 %v774, 4294901760
  %v776 = vsub.f32 %v774, %v775
  %v777 = vand.u32 %v776, 4294901760
  %778 = vmatpush1.msra.mxu0 %v777
  %v779 = vand.u32 %v444, 4294901760
  %v780 = vsub.f32 %v444, %v779
  %v781 = vand.u32 %v780, 4294901760
  %v782 = vsub.f32 %v780, %v781
  %v783 = vand.u32 %v782, 4294901760
  %784 = vmatprep.subr.mxu0 %v783
  %v785 = vand.u32 %v443, 4294901760
  %v786 = vsub.f32 %v443, %v785
  %v787 = vand.u32 %v786, 4294901760
  %v788 = vsub.f32 %v786, %v787
  %v789 = vand.u32 %v788, 4294901760
  %790 = vmatpush1.msra.mxu0 %v789
  %v791 = vand.u32 %v447, 4294901760
  %v792 = vsub.f32 %v447, %v791
  %v793 = vand.u32 %v792, 4294901760
  %v794 = vsub.f32 %v792, %v793
  %v795 = vand.u32 %v794, 4294901760
  %796 = vmatprep.subr.mxu0 %v795
  %v797 = vand.u32 %v446, 4294901760
  %v798 = vsub.f32 %v446, %v797
  %v799 = vand.u32 %v798, 4294901760
  %v800 = vsub.f32 %v798, %v799
  %v801 = vand.u32 %v800, 4294901760
  %802 = vmatpush1.msra.mxu0 %v801
  %v803 = vand.u32 %v450, 4294901760
  %v804 = vsub.f32 %v450, %v803
  %v805 = vand.u32 %v804, 4294901760
  %v806 = vsub.f32 %v804, %v805
  %v807 = vand.u32 %v806, 4294901760
  %808 = vmatprep.subr.mxu0 %v807
  %v809 = vand.u32 %v449, 4294901760
  %v810 = vsub.f32 %v449, %v809
  %v811 = vand.u32 %v810, 4294901760
  %v812 = vsub.f32 %v810, %v811
  %v813 = vand.u32 %v812, 4294901760
  %814 = vmatpush1.msra.mxu0 %v813
  %v815 = vand.u32 %v453, 4294901760
  %v816 = vsub.f32 %v453, %v815
  %v817 = vand.u32 %v816, 4294901760
  %v818 = vsub.f32 %v816, %v817
  %v819 = vand.u32 %v818, 4294901760
  %820 = vmatprep.subr.mxu0 %v819
  %v821 = vand.u32 %v452, 4294901760
  %v822 = vsub.f32 %v452, %v821
  %v823 = vand.u32 %v822, 4294901760
  %v824 = vsub.f32 %v822, %v823
  %v825 = vand.u32 %v824, 4294901760
  %826 = vmatpush1.msra.mxu0 %v825
  %v827 = vand.u32 %v456, 4294901760
  %v828 = vsub.f32 %v456, %v827
  %v829 = vand.u32 %v828, 4294901760
  %v830 = vsub.f32 %v828, %v829
  %v831 = vand.u32 %v830, 4294901760
  %832 = vmatprep.subr.mxu0 %v831
  %v833 = vand.u32 %v455, 4294901760
  %v834 = vsub.f32 %v455, %v833
  %v835 = vand.u32 %v834, 4294901760
  %v836 = vsub.f32 %v834, %v835
  %v837 = vand.u32 %v836, 4294901760
  %838 = vmatpush1.msra.mxu0 %v837
  %v839 = vand.u32 %v459, 4294901760
  %v840 = vsub.f32 %v459, %v839
  %v841 = vand.u32 %v840, 4294901760
  %v842 = vsub.f32 %v840, %v841
  %v843 = vand.u32 %v842, 4294901760
  %844 = vmatprep.subr.mxu0 %v843
  %v845 = vand.u32 %v458, 4294901760
  %v846 = vsub.f32 %v458, %v845
  %v847 = vand.u32 %v846, 4294901760
  %v848 = vsub.f32 %v846, %v847
  %v849 = vand.u32 %v848, 4294901760
  %850 = vmatpush1.msra.mxu0 %v849
  %v851 = vand.u32 %v462, 4294901760
  %v852 = vsub.f32 %v462, %v851
  %v853 = vand.u32 %v852, 4294901760
  %v854 = vsub.f32 %v852, %v853
  %v855 = vand.u32 %v854, 4294901760
  %856 = vmatprep.subr.mxu0 %v855
  %v857 = vand.u32 %v461, 4294901760
  %v858 = vsub.f32 %v461, %v857
  %v859 = vand.u32 %v858, 4294901760
  %v860 = vsub.f32 %v858, %v859
  %v861 = vand.u32 %v860, 4294901760
  %862 = vmatpush1.msra.mxu0 %v861
  %v863 = vand.u32 %v465, 4294901760
  %v864 = vsub.f32 %v465, %v863
  %v865 = vand.u32 %v864, 4294901760
  %v866 = vsub.f32 %v864, %v865
  %v867 = vand.u32 %v866, 4294901760
  %868 = vmatprep.subr.mxu0 %v867
  %v869 = vand.u32 %v464, 4294901760
  %v870 = vsub.f32 %v464, %v869
  %v871 = vand.u32 %v870, 4294901760
  %v872 = vsub.f32 %v870, %v871
  %v873 = vand.u32 %v872, 4294901760
  %874 = vmatpush1.msra.mxu0 %v873
  %v875 = vand.u32 %v468, 4294901760
  %v876 = vsub.f32 %v468, %v875
  %v877 = vand.u32 %v876, 4294901760
  %v878 = vsub.f32 %v876, %v877
  %v879 = vand.u32 %v878, 4294901760
  %880 = vmatprep.subr.mxu0 %v879
  %v881 = vand.u32 %v467, 4294901760
  %v882 = vsub.f32 %v467, %v881
  %v883 = vand.u32 %v882, 4294901760
  %v884 = vsub.f32 %v882, %v883
  %v885 = vand.u32 %v884, 4294901760
  %886 = vmatpush1.msra.mxu0 %v885
  %v887 = vand.u32 %v471, 4294901760
  %v888 = vsub.f32 %v471, %v887
  %v889 = vand.u32 %v888, 4294901760
  %v890 = vsub.f32 %v888, %v889
  %v891 = vand.u32 %v890, 4294901760
  %892 = vmatprep.subr.mxu0 %v891
  %v893 = vand.u32 %v470, 4294901760
  %v894 = vsub.f32 %v470, %v893
  %v895 = vand.u32 %v894, 4294901760
  %v896 = vsub.f32 %v894, %v895
  %v897 = vand.u32 %v896, 4294901760
  %898 = vmatpush1.msra.mxu0 %v897
  %v899 = vand.u32 %v474, 4294901760
  %v900 = vsub.f32 %v474, %v899
  %v901 = vand.u32 %v900, 4294901760
  %v902 = vsub.f32 %v900, %v901
  %v903 = vand.u32 %v902, 4294901760
  %904 = vmatprep.subr.mxu0 %v903
  %v905 = vand.u32 %v473, 4294901760
  %v906 = vsub.f32 %v473, %v905
  %v907 = vand.u32 %v906, 4294901760
  %v908 = vsub.f32 %v906, %v907
  %v909 = vand.u32 %v908, 4294901760
  %910 = vmatpush1.msra.mxu0 %v909
  %v911 = vand.u32 %v477, 4294901760
  %v912 = vsub.f32 %v477, %v911
  %v913 = vand.u32 %v912, 4294901760
  %v914 = vsub.f32 %v912, %v913
  %v915 = vand.u32 %v914, 4294901760
  %916 = vmatprep.subr.mxu0 %v915
  %v917 = vand.u32 %v476, 4294901760
  %v918 = vsub.f32 %v476, %v917
  %v919 = vand.u32 %v918, 4294901760
  %v920 = vsub.f32 %v918, %v919
  %v921 = vand.u32 %v920, 4294901760
  %922 = vmatpush1.msra.mxu0 %v921
  %v923 = vand.u32 %v480, 4294901760
  %v924 = vsub.f32 %v480, %v923
  %v925 = vand.u32 %v924, 4294901760
  %v926 = vsub.f32 %v924, %v925
  %v927 = vand.u32 %v926, 4294901760
  %928 = vmatprep.subr.mxu0 %v927
  %v929 = vand.u32 %v479, 4294901760
  %v930 = vsub.f32 %v479, %v929
  %v931 = vand.u32 %v930, 4294901760
  %v932 = vsub.f32 %v930, %v931
  %v933 = vand.u32 %v932, 4294901760
  %934 = vmatpush1.msra.mxu0 %v933
  %v935 = vand.u32 %v483, 4294901760
  %v936 = vsub.f32 %v483, %v935
  %v937 = vand.u32 %v936, 4294901760
  %v938 = vsub.f32 %v936, %v937
  %v939 = vand.u32 %v938, 4294901760
  %940 = vmatprep.subr.mxu0 %v939
  %v941 = vand.u32 %v482, 4294901760
  %v942 = vsub.f32 %v482, %v941
  %v943 = vand.u32 %v942, 4294901760
  %v944 = vsub.f32 %v942, %v943
  %v945 = vand.u32 %v944, 4294901760
  %946 = vmatpush1.msra.mxu0 %v945
  %v947 = vand.u32 %v486, 4294901760
  %v948 = vsub.f32 %v486, %v947
  %v949 = vand.u32 %v948, 4294901760
  %v950 = vsub.f32 %v948, %v949
  %v951 = vand.u32 %v950, 4294901760
  %952 = vmatprep.subr.mxu0 %v951
  %v953 = vand.u32 %v485, 4294901760
  %v954 = vsub.f32 %v485, %v953
  %v955 = vand.u32 %v954, 4294901760
  %v956 = vsub.f32 %v954, %v955
  %v957 = vand.u32 %v956, 4294901760
  %958 = vmatpush1.msra.mxu0 %v957
  %v959 = vand.u32 %v489, 4294901760
  %v960 = vsub.f32 %v489, %v959
  %v961 = vand.u32 %v960, 4294901760
  %v962 = vsub.f32 %v960, %v961
  %v963 = vand.u32 %v962, 4294901760
  %964 = vmatprep.subr.mxu0 %v963
  %v965 = vand.u32 %v488, 4294901760
  %v966 = vsub.f32 %v488, %v965
  %v967 = vand.u32 %v966, 4294901760
  %v968 = vsub.f32 %v966, %v967
  %v969 = vand.u32 %v968, 4294901760
  %970 = vmatpush1.msra.mxu0 %v969
  %v971 = vand.u32 %v492, 4294901760
  %v972 = vsub.f32 %v492, %v971
  %v973 = vand.u32 %v972, 4294901760
  %v974 = vsub.f32 %v972, %v973
  %v975 = vand.u32 %v974, 4294901760
  %976 = vmatprep.subr.mxu0 %v975
  %v977 = vand.u32 %v491, 4294901760
  %v978 = vsub.f32 %v491, %v977
  %v979 = vand.u32 %v978, 4294901760
  %v980 = vsub.f32 %v978, %v979
  %v981 = vand.u32 %v980, 4294901760
  %982 = vmatpush1.msra.mxu0 %v981
  %v983 = vand.u32 %v495, 4294901760
  %v984 = vsub.f32 %v495, %v983
  %v985 = vand.u32 %v984, 4294901760
  %v986 = vsub.f32 %v984, %v985
  %v987 = vand.u32 %v986, 4294901760
  %988 = vmatprep.subr.mxu0 %v987
  %v989 = vand.u32 %v494, 4294901760
  %v990 = vsub.f32 %v494, %v989
  %v991 = vand.u32 %v990, 4294901760
  %v992 = vsub.f32 %v990, %v991
  %v993 = vand.u32 %v992, 4294901760
  %994 = vmatpush1.msra.mxu0 %v993
  %v995 = vand.u32 %v498, 4294901760
  %v996 = vsub.f32 %v498, %v995
  %v997 = vand.u32 %v996, 4294901760
  %v998 = vsub.f32 %v996, %v997
  %v999 = vand.u32 %v998, 4294901760
  %1000 = vmatprep.subr.mxu0 %v999
  %v1001 = vand.u32 %v497, 4294901760
  %v1002 = vsub.f32 %v497, %v1001
  %v1003 = vand.u32 %v1002, 4294901760
  %v1004 = vsub.f32 %v1002, %v1003
  %v1005 = vand.u32 %v1004, 4294901760
  %1006 = vmatpush1.msra.mxu0 %v1005
  %v1007 = vand.u32 %v501, 4294901760
  %v1008 = vsub.f32 %v501, %v1007
  %v1009 = vand.u32 %v1008, 4294901760
  %v1010 = vsub.f32 %v1008, %v1009
  %v1011 = vand.u32 %v1010, 4294901760
  %1012 = vmatprep.subr.mxu0 %v1011
  %v1013 = vand.u32 %v500, 4294901760
  %v1014 = vsub.f32 %v500, %v1013
  %v1015 = vand.u32 %v1014, 4294901760
  %v1016 = vsub.f32 %v1014, %v1015
  %v1017 = vand.u32 %v1016, 4294901760
  %1018 = vmatpush1.msra.mxu0 %v1017
  %v1019 = vand.u32 %v504, 4294901760
  %v1020 = vsub.f32 %v504, %v1019
  %v1021 = vand.u32 %v1020, 4294901760
  %v1022 = vsub.f32 %v1020, %v1021
  %v1023 = vand.u32 %v1022, 4294901760
  %1024 = vmatprep.subr.mxu0 %v1023
  %v1025 = vand.u32 %v503, 4294901760
  %v1026 = vsub.f32 %v503, %v1025
  %v1027 = vand.u32 %v1026, 4294901760
  %v1028 = vsub.f32 %v1026, %v1027
  %v1029 = vand.u32 %v1028, 4294901760
  %1030 = vmatpush1.msra.mxu0 %v1029
  %v1031 = vand.u32 %v507, 4294901760
  %v1032 = vsub.f32 %v507, %v1031
  %v1033 = vand.u32 %v1032, 4294901760
  %v1034 = vsub.f32 %v1032, %v1033
  %v1035 = vand.u32 %v1034, 4294901760
  %1036 = vmatprep.subr.mxu0 %v1035
  %v1037 = vand.u32 %v506, 4294901760
  %v1038 = vsub.f32 %v506, %v1037
  %v1039 = vand.u32 %v1038, 4294901760
  %v1040 = vsub.f32 %v1038, %v1039
  %v1041 = vand.u32 %v1040, 4294901760
  %1042 = vmatpush1.msra.mxu0 %v1041
  %v1043 = vand.u32 %v510, 4294901760
  %v1044 = vsub.f32 %v510, %v1043
  %v1045 = vand.u32 %v1044, 4294901760
  %v1046 = vsub.f32 %v1044, %v1045
  %v1047 = vand.u32 %v1046, 4294901760
  %1048 = vmatprep.subr.mxu0 %v1047
  %v1049 = vand.u32 %v509, 4294901760
  %v1050 = vsub.f32 %v509, %v1049
  %v1051 = vand.u32 %v1050, 4294901760
  %v1052 = vsub.f32 %v1050, %v1051
  %v1053 = vand.u32 %v1052, 4294901760
  %1054 = vmatpush1.msra.mxu0 %v1053
  %v1055 = vand.u32 %v513, 4294901760
  %v1056 = vsub.f32 %v513, %v1055
  %v1057 = vand.u32 %v1056, 4294901760
  %v1058 = vsub.f32 %v1056, %v1057
  %v1059 = vand.u32 %v1058, 4294901760
  %1060 = vmatprep.subr.mxu0 %v1059
  %v1061 = vand.u32 %v512, 4294901760
  %v1062 = vsub.f32 %v512, %v1061
  %v1063 = vand.u32 %v1062, 4294901760
  %v1064 = vsub.f32 %v1062, %v1063
  %v1065 = vand.u32 %v1064, 4294901760
  %1066 = vmatpush1.msra.mxu0 %v1065
  %v1067 = vand.u32 %v516, 4294901760
  %v1068 = vsub.f32 %v516, %v1067
  %v1069 = vand.u32 %v1068, 4294901760
  %v1070 = vsub.f32 %v1068, %v1069
  %v1071 = vand.u32 %v1070, 4294901760
  %1072 = vmatprep.subr.mxu0 %v1071
  %v1073 = vand.u32 %v515, 4294901760
  %v1074 = vsub.f32 %v515, %v1073
  %v1075 = vand.u32 %v1074, 4294901760
  %v1076 = vsub.f32 %v1074, %v1075
  %v1077 = vand.u32 %v1076, 4294901760
  %1078 = vmatpush1.msra.mxu0 %v1077
  %v1079 = vand.u32 %v417, 4294901760
  %1080 = vmatprep.mubr.f32.mxu0 %v1079
  %v1081 = vand.u32 %v416, 4294901760
  %1082 = vmatmul.mubr.f32.gmra.mrb[0].mxu0 %v1081
  %v1083 = vpop.f32.mrb[0].mxu0
  %v1084 = vadd.f32 %v659, %v1083
  %v1085 = vpop.f32.mrb[0].mxu0
  %v1086 = vadd.f32 %v661, %v1085
  %v1087 = vand.u32 %v419, 4294901760
  %1088 = vmatprep.mubr.f32.mxu0 %v1087
  %v1089 = vand.u32 %v418, 4294901760
  %1090 = vmatmul.mubr.f32.gmra.mrb[0].mxu0 %v1089
  %v1091 = vpop.f32.mrb[0].mxu0
  %v1092 = vadd.f32 %v675, %v1091
  %v1093 = vpop.f32.mrb[0].mxu0
  %v1094 = vadd.f32 %v677, %v1093
  %v1095 = vand.u32 %v421, 4294901760
  %1096 = vmatprep.mubr.f32.mxu0 %v1095
  %v1097 = vand.u32 %v420, 4294901760
  %1098 = vmatmul.mubr.f32.gmra.mrb[0].mxu0 %v1097
  %v1099 = vpop.f32.mrb[0].mxu0
  %v1100 = vadd.f32 %v691, %v1099
  %v1101 = vpop.f32.mrb[0].mxu0
  %v1102 = vadd.f32 %v693, %v1101
  %1103 = vdwg.mxu0
  %v1104 = vand.u32 %v423, 4294901760
  %v1105 = vsub.f32 %v423, %v1104
  %1106 = vmatprep.subr.mxu0 %v1105
  %v1107 = vand.u32 %v422, 4294901760
  %v1108 = vsub.f32 %v422, %v1107
  %1109 = vmatpush1.msra.mxu0 %v1108
  %v1110 = vand.u32 %v426, 4294901760
  %v1111 = vsub.f32 %v426, %v1110
  %1112 = vmatprep.subr.mxu0 %v1111
  %v1113 = vand.u32 %v425, 4294901760
  %v1114 = vsub.f32 %v425, %v1113
  %1115 = vmatpush1.msra.mxu0 %v1114
  %v1116 = vand.u32 %v429, 4294901760
  %v1117 = vsub.f32 %v429, %v1116
  %1118 = vmatprep.subr.mxu0 %v1117
  %v1119 = vand.u32 %v428, 4294901760
  %v1120 = vsub.f32 %v428, %v1119
  %1121 = vmatpush1.msra.mxu0 %v1120
  %v1122 = vand.u32 %v432, 4294901760
  %v1123 = vsub.f32 %v432, %v1122
  %1124 = vmatprep.subr.mxu0 %v1123
  %v1125 = vand.u32 %v431, 4294901760
  %v1126 = vsub.f32 %v431, %v1125
  %1127 = vmatpush1.msra.mxu0 %v1126
  %v1128 = vand.u32 %v435, 4294901760
  %v1129 = vsub.f32 %v435, %v1128
  %1130 = vmatprep.subr.mxu0 %v1129
  %v1131 = vand.u32 %v434, 4294901760
  %v1132 = vsub.f32 %v434, %v1131
  %1133 = vmatpush1.msra.mxu0 %v1132
  %v1134 = vand.u32 %v438, 4294901760
  %v1135 = vsub.f32 %v438, %v1134
  %1136 = vmatprep.subr.mxu0 %v1135
  %v1137 = vand.u32 %v437, 4294901760
  %v1138 = vsub.f32 %v437, %v1137
  %1139 = vmatpush1.msra.mxu0 %v1138
  %v1140 = vand.u32 %v441, 4294901760
  %v1141 = vsub.f32 %v441, %v1140
  %1142 = vmatprep.subr.mxu0 %v1141
  %v1143 = vand.u32 %v440, 4294901760
  %v1144 = vsub.f32 %v440, %v1143
  %1145 = vmatpush1.msra.mxu0 %v1144
  %v1146 = vand.u32 %v444, 4294901760
  %v1147 = vsub.f32 %v444, %v1146
  %1148 = vmatprep.subr.mxu0 %v1147
  %v1149 = vand.u32 %v443, 4294901760
  %v1150 = vsub.f32 %v443, %v1149
  %1151 = vmatpush1.msra.mxu0 %v1150
  %v1152 = vand.u32 %v447, 4294901760
  %v1153 = vsub.f32 %v447, %v1152
  %1154 = vmatprep.subr.mxu0 %v1153
  %v1155 = vand.u32 %v446, 4294901760
  %v1156 = vsub.f32 %v446, %v1155
  %1157 = vmatpush1.msra.mxu0 %v1156
  %v1158 = vand.u32 %v450, 4294901760
  %v1159 = vsub.f32 %v450, %v1158
  %1160 = vmatprep.subr.mxu0 %v1159
  %v1161 = vand.u32 %v449, 4294901760
  %v1162 = vsub.f32 %v449, %v1161
  %1163 = vmatpush1.msra.mxu0 %v1162
  %v1164 = vand.u32 %v453, 4294901760
  %v1165 = vsub.f32 %v453, %v1164
  %1166 = vmatprep.subr.mxu0 %v1165
  %v1167 = vand.u32 %v452, 4294901760
  %v1168 = vsub.f32 %v452, %v1167
  %1169 = vmatpush1.msra.mxu0 %v1168
  %v1170 = vand.u32 %v456, 4294901760
  %v1171 = vsub.f32 %v456, %v1170
  %1172 = vmatprep.subr.mxu0 %v1171
  %v1173 = vand.u32 %v455, 4294901760
  %v1174 = vsub.f32 %v455, %v1173
  %1175 = vmatpush1.msra.mxu0 %v1174
  %v1176 = vand.u32 %v459, 4294901760
  %v1177 = vsub.f32 %v459, %v1176
  %1178 = vmatprep.subr.mxu0 %v1177
  %v1179 = vand.u32 %v458, 4294901760
  %v1180 = vsub.f32 %v458, %v1179
  %1181 = vmatpush1.msra.mxu0 %v1180
  %v1182 = vand.u32 %v462, 4294901760
  %v1183 = vsub.f32 %v462, %v1182
  %1184 = vmatprep.subr.mxu0 %v1183
  %v1185 = vand.u32 %v461, 4294901760
  %v1186 = vsub.f32 %v461, %v1185
  %1187 = vmatpush1.msra.mxu0 %v1186
  %v1188 = vand.u32 %v465, 4294901760
  %v1189 = vsub.f32 %v465, %v1188
  %1190 = vmatprep.subr.mxu0 %v1189
  %v1191 = vand.u32 %v464, 4294901760
  %v1192 = vsub.f32 %v464, %v1191
  %1193 = vmatpush1.msra.mxu0 %v1192
  %v1194 = vand.u32 %v468, 4294901760
  %v1195 = vsub.f32 %v468, %v1194
  %1196 = vmatprep.subr.mxu0 %v1195
  %v1197 = vand.u32 %v467, 4294901760
  %v1198 = vsub.f32 %v467, %v1197
  %1199 = vmatpush1.msra.mxu0 %v1198
  %v1200 = vand.u32 %v471, 4294901760
  %v1201 = vsub.f32 %v471, %v1200
  %1202 = vmatprep.subr.mxu0 %v1201
  %v1203 = vand.u32 %v470, 4294901760
  %v1204 = vsub.f32 %v470, %v1203
  %1205 = vmatpush1.msra.mxu0 %v1204
  %v1206 = vand.u32 %v474, 4294901760
  %v1207 = vsub.f32 %v474, %v1206
  %1208 = vmatprep.subr.mxu0 %v1207
  %v1209 = vand.u32 %v473, 4294901760
  %v1210 = vsub.f32 %v473, %v1209
  %1211 = vmatpush1.msra.mxu0 %v1210
  %v1212 = vand.u32 %v477, 4294901760
  %v1213 = vsub.f32 %v477, %v1212
  %1214 = vmatprep.subr.mxu0 %v1213
  %v1215 = vand.u32 %v476, 4294901760
  %v1216 = vsub.f32 %v476, %v1215
  %1217 = vmatpush1.msra.mxu0 %v1216
  %v1218 = vand.u32 %v480, 4294901760
  %v1219 = vsub.f32 %v480, %v1218
  %1220 = vmatprep.subr.mxu0 %v1219
  %v1221 = vand.u32 %v479, 4294901760
  %v1222 = vsub.f32 %v479, %v1221
  %1223 = vmatpush1.msra.mxu0 %v1222
  %v1224 = vand.u32 %v483, 4294901760
  %v1225 = vsub.f32 %v483, %v1224
  %1226 = vmatprep.subr.mxu0 %v1225
  %v1227 = vand.u32 %v482, 4294901760
  %v1228 = vsub.f32 %v482, %v1227
  %1229 = vmatpush1.msra.mxu0 %v1228
  %v1230 = vand.u32 %v486, 4294901760
  %v1231 = vsub.f32 %v486, %v1230
  %1232 = vmatprep.subr.mxu0 %v1231
  %v1233 = vand.u32 %v485, 4294901760
  %v1234 = vsub.f32 %v485, %v1233
  %1235 = vmatpush1.msra.mxu0 %v1234
  %v1236 = vand.u32 %v489, 4294901760
  %v1237 = vsub.f32 %v489, %v1236
  %1238 = vmatprep.subr.mxu0 %v1237
  %v1239 = vand.u32 %v488, 4294901760
  %v1240 = vsub.f32 %v488, %v1239
  %1241 = vmatpush1.msra.mxu0 %v1240
  %v1242 = vand.u32 %v492, 4294901760
  %v1243 = vsub.f32 %v492, %v1242
  %1244 = vmatprep.subr.mxu0 %v1243
  %v1245 = vand.u32 %v491, 4294901760
  %v1246 = vsub.f32 %v491, %v1245
  %1247 = vmatpush1.msra.mxu0 %v1246
  %v1248 = vand.u32 %v495, 4294901760
  %v1249 = vsub.f32 %v495, %v1248
  %1250 = vmatprep.subr.mxu0 %v1249
  %v1251 = vand.u32 %v494, 4294901760
  %v1252 = vsub.f32 %v494, %v1251
  %1253 = vmatpush1.msra.mxu0 %v1252
  %v1254 = vand.u32 %v498, 4294901760
  %v1255 = vsub.f32 %v498, %v1254
  %1256 = vmatprep.subr.mxu0 %v1255
  %v1257 = vand.u32 %v497, 4294901760
  %v1258 = vsub.f32 %v497, %v1257
  %1259 = vmatpush1.msra.mxu0 %v1258
  %v1260 = vand.u32 %v501, 4294901760
  %v1261 = vsub.f32 %v501, %v1260
  %1262 = vmatprep.subr.mxu0 %v1261
  %v1263 = vand.u32 %v500, 4294901760
  %v1264 = vsub.f32 %v500, %v1263
  %1265 = vmatpush1.msra.mxu0 %v1264
  %v1266 = vand.u32 %v504, 4294901760
  %v1267 = vsub.f32 %v504, %v1266
  %1268 = vmatprep.subr.mxu0 %v1267
  %v1269 = vand.u32 %v503, 4294901760
  %v1270 = vsub.f32 %v503, %v1269
  %1271 = vmatpush1.msra.mxu0 %v1270
  %v1272 = vand.u32 %v507, 4294901760
  %v1273 = vsub.f32 %v507, %v1272
  %1274 = vmatprep.subr.mxu0 %v1273
  %v1275 = vand.u32 %v506, 4294901760
  %v1276 = vsub.f32 %v506, %v1275
  %1277 = vmatpush1.msra.mxu0 %v1276
  %v1278 = vand.u32 %v510, 4294901760
  %v1279 = vsub.f32 %v510, %v1278
  %1280 = vmatprep.subr.mxu0 %v1279
  %v1281 = vand.u32 %v509, 4294901760
  %v1282 = vsub.f32 %v509, %v1281
  %1283 = vmatpush1.msra.mxu0 %v1282
  %v1284 = vand.u32 %v513, 4294901760
  %v1285 = vsub.f32 %v513, %v1284
  %1286 = vmatprep.subr.mxu0 %v1285
  %v1287 = vand.u32 %v512, 4294901760
  %v1288 = vsub.f32 %v512, %v1287
  %1289 = vmatpush1.msra.mxu0 %v1288
  %v1290 = vand.u32 %v516, 4294901760
  %v1291 = vsub.f32 %v516, %v1290
  %1292 = vmatprep.subr.mxu0 %v1291
  %v1293 = vand.u32 %v515, 4294901760
  %v1294 = vsub.f32 %v515, %v1293
  %1295 = vmatpush1.msra.mxu0 %v1294
  %v1296 = vand.u32 %v417, 4294901760
  %v1297 = vsub.f32 %v417, %v1296
  %1298 = vmatprep.mubr.f32.mxu0 %v1297
  %v1299 = vand.u32 %v416, 4294901760
  %v1300 = vsub.f32 %v416, %v1299
  %1301 = vmatmul.mubr.f32.gmra.mrb[0].mxu0 %v1300
  %v1302 = vpop.f32.mrb[0].mxu0
  %v1303 = vadd.f32 %v1084, %v1302
  %v1304 = vpop.f32.mrb[0].mxu0
  %v1305 = vadd.f32 %v1086, %v1304
  %v1306 = vand.u32 %v419, 4294901760
  %v1307 = vsub.f32 %v419, %v1306
  %1308 = vmatprep.mubr.f32.mxu0 %v1307
  %v1309 = vand.u32 %v418, 4294901760
  %v1310 = vsub.f32 %v418, %v1309
  %1311 = vmatmul.mubr.f32.gmra.mrb[0].mxu0 %v1310
  %v1312 = vpop.f32.mrb[0].mxu0
  %v1313 = vadd.f32 %v1092, %v1312
  %v1314 = vpop.f32.mrb[0].mxu0
  %v1315 = vadd.f32 %v1094, %v1314
  %v1316 = vand.u32 %v421, 4294901760
  %v1317 = vsub.f32 %v421, %v1316
  %1318 = vmatprep.mubr.f32.mxu0 %v1317
  %v1319 = vand.u32 %v420, 4294901760
  %v1320 = vsub.f32 %v420, %v1319
  %1321 = vmatmul.mubr.f32.gmra.mrb[0].mxu0 %v1320
  %v1322 = vpop.f32.mrb[0].mxu0
  %v1323 = vadd.f32 %v1100, %v1322
  %v1324 = vpop.f32.mrb[0].mxu0
  %v1325 = vadd.f32 %v1102, %v1324
  %1326 = vdwg.mxu0
  %v1327 = vand.u32 %v423, 4294901760
  %1328 = vmatprep.subr.mxu0 %v1327
  %v1329 = vand.u32 %v422, 4294901760
  %1330 = vmatpush1.msra.mxu0 %v1329
  %v1331 = vand.u32 %v426, 4294901760
  %1332 = vmatprep.subr.mxu0 %v1331
  %v1333 = vand.u32 %v425, 4294901760
  %1334 = vmatpush1.msra.mxu0 %v1333
  %v1335 = vand.u32 %v429, 4294901760
  %1336 = vmatprep.subr.mxu0 %v1335
  %v1337 = vand.u32 %v428, 4294901760
  %1338 = vmatpush1.msra.mxu0 %v1337
  %v1339 = vand.u32 %v432, 4294901760
  %1340 = vmatprep.subr.mxu0 %v1339
  %v1341 = vand.u32 %v431, 4294901760
  %1342 = vmatpush1.msra.mxu0 %v1341
  %v1343 = vand.u32 %v435, 4294901760
  %1344 = vmatprep.subr.mxu0 %v1343
  %v1345 = vand.u32 %v434, 4294901760
  %1346 = vmatpush1.msra.mxu0 %v1345
  %v1347 = vand.u32 %v438, 4294901760
  %1348 = vmatprep.subr.mxu0 %v1347
  %v1349 = vand.u32 %v437, 4294901760
  %1350 = vmatpush1.msra.mxu0 %v1349
  %v1351 = vand.u32 %v441, 4294901760
  %1352 = vmatprep.subr.mxu0 %v1351
  %v1353 = vand.u32 %v440, 4294901760
  %1354 = vmatpush1.msra.mxu0 %v1353
  %v1355 = vand.u32 %v444, 4294901760
  %1356 = vmatprep.subr.mxu0 %v1355
  %v1357 = vand.u32 %v443, 4294901760
  %1358 = vmatpush1.msra.mxu0 %v1357
  %v1359 = vand.u32 %v447, 4294901760
  %1360 = vmatprep.subr.mxu0 %v1359
  %v1361 = vand.u32 %v446, 4294901760
  %1362 = vmatpush1.msra.mxu0 %v1361
  %v1363 = vand.u32 %v450, 4294901760
  %1364 = vmatprep.subr.mxu0 %v1363
  %v1365 = vand.u32 %v449, 4294901760
  %1366 = vmatpush1.msra.mxu0 %v1365
  %v1367 = vand.u32 %v453, 4294901760
  %1368 = vmatprep.subr.mxu0 %v1367
  %v1369 = vand.u32 %v452, 4294901760
  %1370 = vmatpush1.msra.mxu0 %v1369
  %v1371 = vand.u32 %v456, 4294901760
  %1372 = vmatprep.subr.mxu0 %v1371
  %v1373 = vand.u32 %v455, 4294901760
  %1374 = vmatpush1.msra.mxu0 %v1373
  %v1375 = vand.u32 %v459, 4294901760
  %1376 = vmatprep.subr.mxu0 %v1375
  %v1377 = vand.u32 %v458, 4294901760
  %1378 = vmatpush1.msra.mxu0 %v1377
  %v1379 = vand.u32 %v462, 4294901760
  %1380 = vmatprep.subr.mxu0 %v1379
  %v1381 = vand.u32 %v461, 4294901760
  %1382 = vmatpush1.msra.mxu0 %v1381
  %v1383 = vand.u32 %v465, 4294901760
  %1384 = vmatprep.subr.mxu0 %v1383
  %v1385 = vand.u32 %v464, 4294901760
  %1386 = vmatpush1.msra.mxu0 %v1385
  %v1387 = vand.u32 %v468, 4294901760
  %1388 = vmatprep.subr.mxu0 %v1387
  %v1389 = vand.u32 %v467, 4294901760
  %1390 = vmatpush1.msra.mxu0 %v1389
  %v1391 = vand.u32 %v471, 4294901760
  %1392 = vmatprep.subr.mxu0 %v1391
  %v1393 = vand.u32 %v470, 4294901760
  %1394 = vmatpush1.msra.mxu0 %v1393
  %v1395 = vand.u32 %v474, 4294901760
  %1396 = vmatprep.subr.mxu0 %v1395
  %v1397 = vand.u32 %v473, 4294901760
  %1398 = vmatpush1.msra.mxu0 %v1397
  %v1399 = vand.u32 %v477, 4294901760
  %1400 = vmatprep.subr.mxu0 %v1399
  %v1401 = vand.u32 %v476, 4294901760
  %1402 = vmatpush1.msra.mxu0 %v1401
  %v1403 = vand.u32 %v480, 4294901760
  %1404 = vmatprep.subr.mxu0 %v1403
  %v1405 = vand.u32 %v479, 4294901760
  %1406 = vmatpush1.msra.mxu0 %v1405
  %v1407 = vand.u32 %v483, 4294901760
  %1408 = vmatprep.subr.mxu0 %v1407
  %v1409 = vand.u32 %v482, 4294901760
  %1410 = vmatpush1.msra.mxu0 %v1409
  %v1411 = vand.u32 %v486, 4294901760
  %1412 = vmatprep.subr.mxu0 %v1411
  %v1413 = vand.u32 %v485, 4294901760
  %1414 = vmatpush1.msra.mxu0 %v1413
  %v1415 = vand.u32 %v489, 4294901760
  %1416 = vmatprep.subr.mxu0 %v1415
  %v1417 = vand.u32 %v488, 4294901760
  %1418 = vmatpush1.msra.mxu0 %v1417
  %v1419 = vand.u32 %v492, 4294901760
  %1420 = vmatprep.subr.mxu0 %v1419
  %v1421 = vand.u32 %v491, 4294901760
  %1422 = vmatpush1.msra.mxu0 %v1421
  %v1423 = vand.u32 %v495, 4294901760
  %1424 = vmatprep.subr.mxu0 %v1423
  %v1425 = vand.u32 %v494, 4294901760
  %1426 = vmatpush1.msra.mxu0 %v1425
  %v1427 = vand.u32 %v498, 4294901760
  %1428 = vmatprep.subr.mxu0 %v1427
  %v1429 = vand.u32 %v497, 4294901760
  %1430 = vmatpush1.msra.mxu0 %v1429
  %v1431 = vand.u32 %v501, 4294901760
  %1432 = vmatprep.subr.mxu0 %v1431
  %v1433 = vand.u32 %v500, 4294901760
  %1434 = vmatpush1.msra.mxu0 %v1433
  %v1435 = vand.u32 %v504, 4294901760
  %1436 = vmatprep.subr.mxu0 %v1435
  %v1437 = vand.u32 %v503, 4294901760
  %1438 = vmatpush1.msra.mxu0 %v1437
  %v1439 = vand.u32 %v507, 4294901760
  %1440 = vmatprep.subr.mxu0 %v1439
  %v1441 = vand.u32 %v506, 4294901760
  %1442 = vmatpush1.msra.mxu0 %v1441
  %v1443 = vand.u32 %v510, 4294901760
  %1444 = vmatprep.subr.mxu0 %v1443
  %v1445 = vand.u32 %v509, 4294901760
  %1446 = vmatpush1.msra.mxu0 %v1445
  %v1447 = vand.u32 %v513, 4294901760
  %1448 = vmatprep.subr.mxu0 %v1447
  %v1449 = vand.u32 %v512, 4294901760
  %1450 = vmatpush1.msra.mxu0 %v1449
  %v1451 = vand.u32 %v516, 4294901760
  %1452 = vmatprep.subr.mxu0 %v1451
  %v1453 = vand.u32 %v515, 4294901760
  %1454 = vmatpush1.msra.mxu0 %v1453
  %v1455 = vand.u32 %v417, 4294901760
  %v1456 = vsub.f32 %v417, %v1455
  %v1457 = vand.u32 %v1456, 4294901760
  %1458 = vmatprep.mubr.f32.mxu0 %v1457
  %v1459 = vand.u32 %v416, 4294901760
  %v1460 = vsub.f32 %v416, %v1459
  %v1461 = vand.u32 %v1460, 4294901760
  %1462 = vmatmul.mubr.f32.gmra.mrb[0].mxu0 %v1461
  %v1463 = vpop.f32.mrb[0].mxu0
  %v1464 = vadd.f32 %v1303, %v1463
  %v1465 = vpop.f32.mrb[0].mxu0
  %v1466 = vadd.f32 %v1305, %v1465
  %v1467 = vand.u32 %v419, 4294901760
  %v1468 = vsub.f32 %v419, %v1467
  %v1469 = vand.u32 %v1468, 4294901760
  %1470 = vmatprep.mubr.f32.mxu0 %v1469
  %v1471 = vand.u32 %v418, 4294901760
  %v1472 = vsub.f32 %v418, %v1471
  %v1473 = vand.u32 %v1472, 4294901760
  %1474 = vmatmul.mubr.f32.gmra.mrb[0].mxu0 %v1473
  %v1475 = vpop.f32.mrb[0].mxu0
  %v1476 = vadd.f32 %v1313, %v1475
  %v1477 = vpop.f32.mrb[0].mxu0
  %v1478 = vadd.f32 %v1315, %v1477
  %v1479 = vand.u32 %v421, 4294901760
  %v1480 = vsub.f32 %v421, %v1479
  %v1481 = vand.u32 %v1480, 4294901760
  %1482 = vmatprep.mubr.f32.mxu0 %v1481
  %v1483 = vand.u32 %v420, 4294901760
  %v1484 = vsub.f32 %v420, %v1483
  %v1485 = vand.u32 %v1484, 4294901760
  %1486 = vmatmul.mubr.f32.gmra.mrb[0].mxu0 %v1485
  %v1487 = vpop.f32.mrb[0].mxu0
  %v1488 = vadd.f32 %v1323, %v1487
  %v1489 = vpop.f32.mrb[0].mxu0
  %v1490 = vadd.f32 %v1325, %v1489
  %1491 = vdwg.mxu0
  %v1492 = vand.u32 %v423, 4294901760
  %v1493 = vsub.f32 %v423, %v1492
  %v1494 = vand.u32 %v1493, 4294901760
  %1495 = vmatprep.subr.mxu0 %v1494
  %v1496 = vand.u32 %v422, 4294901760
  %v1497 = vsub.f32 %v422, %v1496
  %v1498 = vand.u32 %v1497, 4294901760
  %1499 = vmatpush1.msra.mxu0 %v1498
  %v1500 = vand.u32 %v426, 4294901760
  %v1501 = vsub.f32 %v426, %v1500
  %v1502 = vand.u32 %v1501, 4294901760
  %1503 = vmatprep.subr.mxu0 %v1502
  %v1504 = vand.u32 %v425, 4294901760
  %v1505 = vsub.f32 %v425, %v1504
  %v1506 = vand.u32 %v1505, 4294901760
  %1507 = vmatpush1.msra.mxu0 %v1506
  %v1508 = vand.u32 %v429, 4294901760
  %v1509 = vsub.f32 %v429, %v1508
  %v1510 = vand.u32 %v1509, 4294901760
  %1511 = vmatprep.subr.mxu0 %v1510
  %v1512 = vand.u32 %v428, 4294901760
  %v1513 = vsub.f32 %v428, %v1512
  %v1514 = vand.u32 %v1513, 4294901760
  %1515 = vmatpush1.msra.mxu0 %v1514
  %v1516 = vand.u32 %v432, 4294901760
  %v1517 = vsub.f32 %v432, %v1516
  %v1518 = vand.u32 %v1517, 4294901760
  %1519 = vmatprep.subr.mxu0 %v1518
  %v1520 = vand.u32 %v431, 4294901760
  %v1521 = vsub.f32 %v431, %v1520
  %v1522 = vand.u32 %v1521, 4294901760
  %1523 = vmatpush1.msra.mxu0 %v1522
  %v1524 = vand.u32 %v435, 4294901760
  %v1525 = vsub.f32 %v435, %v1524
  %v1526 = vand.u32 %v1525, 4294901760
  %1527 = vmatprep.subr.mxu0 %v1526
  %v1528 = vand.u32 %v434, 4294901760
  %v1529 = vsub.f32 %v434, %v1528
  %v1530 = vand.u32 %v1529, 4294901760
  %1531 = vmatpush1.msra.mxu0 %v1530
  %v1532 = vand.u32 %v438, 4294901760
  %v1533 = vsub.f32 %v438, %v1532
  %v1534 = vand.u32 %v1533, 4294901760
  %1535 = vmatprep.subr.mxu0 %v1534
  %v1536 = vand.u32 %v437, 4294901760
  %v1537 = vsub.f32 %v437, %v1536
  %v1538 = vand.u32 %v1537, 4294901760
  %1539 = vmatpush1.msra.mxu0 %v1538
  %v1540 = vand.u32 %v441, 4294901760
  %v1541 = vsub.f32 %v441, %v1540
  %v1542 = vand.u32 %v1541, 4294901760
  %1543 = vmatprep.subr.mxu0 %v1542
  %v1544 = vand.u32 %v440, 4294901760
  %v1545 = vsub.f32 %v440, %v1544
  %v1546 = vand.u32 %v1545, 4294901760
  %1547 = vmatpush1.msra.mxu0 %v1546
  %v1548 = vand.u32 %v444, 4294901760
  %v1549 = vsub.f32 %v444, %v1548
  %v1550 = vand.u32 %v1549, 4294901760
  %1551 = vmatprep.subr.mxu0 %v1550
  %v1552 = vand.u32 %v443, 4294901760
  %v1553 = vsub.f32 %v443, %v1552
  %v1554 = vand.u32 %v1553, 4294901760
  %1555 = vmatpush1.msra.mxu0 %v1554
  %v1556 = vand.u32 %v447, 4294901760
  %v1557 = vsub.f32 %v447, %v1556
  %v1558 = vand.u32 %v1557, 4294901760
  %1559 = vmatprep.subr.mxu0 %v1558
  %v1560 = vand.u32 %v446, 4294901760
  %v1561 = vsub.f32 %v446, %v1560
  %v1562 = vand.u32 %v1561, 4294901760
  %1563 = vmatpush1.msra.mxu0 %v1562
  %v1564 = vand.u32 %v450, 4294901760
  %v1565 = vsub.f32 %v450, %v1564
  %v1566 = vand.u32 %v1565, 4294901760
  %1567 = vmatprep.subr.mxu0 %v1566
  %v1568 = vand.u32 %v449, 4294901760
  %v1569 = vsub.f32 %v449, %v1568
  %v1570 = vand.u32 %v1569, 4294901760
  %1571 = vmatpush1.msra.mxu0 %v1570
  %v1572 = vand.u32 %v453, 4294901760
  %v1573 = vsub.f32 %v453, %v1572
  %v1574 = vand.u32 %v1573, 4294901760
  %1575 = vmatprep.subr.mxu0 %v1574
  %v1576 = vand.u32 %v452, 4294901760
  %v1577 = vsub.f32 %v452, %v1576
  %v1578 = vand.u32 %v1577, 4294901760
  %1579 = vmatpush1.msra.mxu0 %v1578
  %v1580 = vand.u32 %v456, 4294901760
  %v1581 = vsub.f32 %v456, %v1580
  %v1582 = vand.u32 %v1581, 4294901760
  %1583 = vmatprep.subr.mxu0 %v1582
  %v1584 = vand.u32 %v455, 4294901760
  %v1585 = vsub.f32 %v455, %v1584
  %v1586 = vand.u32 %v1585, 4294901760
  %1587 = vmatpush1.msra.mxu0 %v1586
  %v1588 = vand.u32 %v459, 4294901760
  %v1589 = vsub.f32 %v459, %v1588
  %v1590 = vand.u32 %v1589, 4294901760
  %1591 = vmatprep.subr.mxu0 %v1590
  %v1592 = vand.u32 %v458, 4294901760
  %v1593 = vsub.f32 %v458, %v1592
  %v1594 = vand.u32 %v1593, 4294901760
  %1595 = vmatpush1.msra.mxu0 %v1594
  %v1596 = vand.u32 %v462, 4294901760
  %v1597 = vsub.f32 %v462, %v1596
  %v1598 = vand.u32 %v1597, 4294901760
  %1599 = vmatprep.subr.mxu0 %v1598
  %v1600 = vand.u32 %v461, 4294901760
  %v1601 = vsub.f32 %v461, %v1600
  %v1602 = vand.u32 %v1601, 4294901760
  %1603 = vmatpush1.msra.mxu0 %v1602
  %v1604 = vand.u32 %v465, 4294901760
  %v1605 = vsub.f32 %v465, %v1604
  %v1606 = vand.u32 %v1605, 4294901760
  %1607 = vmatprep.subr.mxu0 %v1606
  %v1608 = vand.u32 %v464, 4294901760
  %v1609 = vsub.f32 %v464, %v1608
  %v1610 = vand.u32 %v1609, 4294901760
  %1611 = vmatpush1.msra.mxu0 %v1610
  %v1612 = vand.u32 %v468, 4294901760
  %v1613 = vsub.f32 %v468, %v1612
  %v1614 = vand.u32 %v1613, 4294901760
  %1615 = vmatprep.subr.mxu0 %v1614
  %v1616 = vand.u32 %v467, 4294901760
  %v1617 = vsub.f32 %v467, %v1616
  %v1618 = vand.u32 %v1617, 4294901760
  %1619 = vmatpush1.msra.mxu0 %v1618
  %v1620 = vand.u32 %v471, 4294901760
  %v1621 = vsub.f32 %v471, %v1620
  %v1622 = vand.u32 %v1621, 4294901760
  %1623 = vmatprep.subr.mxu0 %v1622
  %v1624 = vand.u32 %v470, 4294901760
  %v1625 = vsub.f32 %v470, %v1624
  %v1626 = vand.u32 %v1625, 4294901760
  %1627 = vmatpush1.msra.mxu0 %v1626
  %v1628 = vand.u32 %v474, 4294901760
  %v1629 = vsub.f32 %v474, %v1628
  %v1630 = vand.u32 %v1629, 4294901760
  %1631 = vmatprep.subr.mxu0 %v1630
  %v1632 = vand.u32 %v473, 4294901760
  %v1633 = vsub.f32 %v473, %v1632
  %v1634 = vand.u32 %v1633, 4294901760
  %1635 = vmatpush1.msra.mxu0 %v1634
  %v1636 = vand.u32 %v477, 4294901760
  %v1637 = vsub.f32 %v477, %v1636
  %v1638 = vand.u32 %v1637, 4294901760
  %1639 = vmatprep.subr.mxu0 %v1638
  %v1640 = vand.u32 %v476, 4294901760
  %v1641 = vsub.f32 %v476, %v1640
  %v1642 = vand.u32 %v1641, 4294901760
  %1643 = vmatpush1.msra.mxu0 %v1642
  %v1644 = vand.u32 %v480, 4294901760
  %v1645 = vsub.f32 %v480, %v1644
  %v1646 = vand.u32 %v1645, 4294901760
  %1647 = vmatprep.subr.mxu0 %v1646
  %v1648 = vand.u32 %v479, 4294901760
  %v1649 = vsub.f32 %v479, %v1648
  %v1650 = vand.u32 %v1649, 4294901760
  %1651 = vmatpush1.msra.mxu0 %v1650
  %v1652 = vand.u32 %v483, 4294901760
  %v1653 = vsub.f32 %v483, %v1652
  %v1654 = vand.u32 %v1653, 4294901760
  %1655 = vmatprep.subr.mxu0 %v1654
  %v1656 = vand.u32 %v482, 4294901760
  %v1657 = vsub.f32 %v482, %v1656
  %v1658 = vand.u32 %v1657, 4294901760
  %1659 = vmatpush1.msra.mxu0 %v1658
  %v1660 = vand.u32 %v486, 4294901760
  %v1661 = vsub.f32 %v486, %v1660
  %v1662 = vand.u32 %v1661, 4294901760
  %1663 = vmatprep.subr.mxu0 %v1662
  %v1664 = vand.u32 %v485, 4294901760
  %v1665 = vsub.f32 %v485, %v1664
  %v1666 = vand.u32 %v1665, 4294901760
  %1667 = vmatpush1.msra.mxu0 %v1666
  %v1668 = vand.u32 %v489, 4294901760
  %v1669 = vsub.f32 %v489, %v1668
  %v1670 = vand.u32 %v1669, 4294901760
  %1671 = vmatprep.subr.mxu0 %v1670
  %v1672 = vand.u32 %v488, 4294901760
  %v1673 = vsub.f32 %v488, %v1672
  %v1674 = vand.u32 %v1673, 4294901760
  %1675 = vmatpush1.msra.mxu0 %v1674
  %v1676 = vand.u32 %v492, 4294901760
  %v1677 = vsub.f32 %v492, %v1676
  %v1678 = vand.u32 %v1677, 4294901760
  %1679 = vmatprep.subr.mxu0 %v1678
  %v1680 = vand.u32 %v491, 4294901760
  %v1681 = vsub.f32 %v491, %v1680
  %v1682 = vand.u32 %v1681, 4294901760
  %1683 = vmatpush1.msra.mxu0 %v1682
  %v1684 = vand.u32 %v495, 4294901760
  %v1685 = vsub.f32 %v495, %v1684
  %v1686 = vand.u32 %v1685, 4294901760
  %1687 = vmatprep.subr.mxu0 %v1686
  %v1688 = vand.u32 %v494, 4294901760
  %v1689 = vsub.f32 %v494, %v1688
  %v1690 = vand.u32 %v1689, 4294901760
  %1691 = vmatpush1.msra.mxu0 %v1690
  %v1692 = vand.u32 %v498, 4294901760
  %v1693 = vsub.f32 %v498, %v1692
  %v1694 = vand.u32 %v1693, 4294901760
  %1695 = vmatprep.subr.mxu0 %v1694
  %v1696 = vand.u32 %v497, 4294901760
  %v1697 = vsub.f32 %v497, %v1696
  %v1698 = vand.u32 %v1697, 4294901760
  %1699 = vmatpush1.msra.mxu0 %v1698
  %v1700 = vand.u32 %v501, 4294901760
  %v1701 = vsub.f32 %v501, %v1700
  %v1702 = vand.u32 %v1701, 4294901760
  %1703 = vmatprep.subr.mxu0 %v1702
  %v1704 = vand.u32 %v500, 4294901760
  %v1705 = vsub.f32 %v500, %v1704
  %v1706 = vand.u32 %v1705, 4294901760
  %1707 = vmatpush1.msra.mxu0 %v1706
  %v1708 = vand.u32 %v504, 4294901760
  %v1709 = vsub.f32 %v504, %v1708
  %v1710 = vand.u32 %v1709, 4294901760
  %1711 = vmatprep.subr.mxu0 %v1710
  %v1712 = vand.u32 %v503, 4294901760
  %v1713 = vsub.f32 %v503, %v1712
  %v1714 = vand.u32 %v1713, 4294901760
  %1715 = vmatpush1.msra.mxu0 %v1714
  %v1716 = vand.u32 %v507, 4294901760
  %v1717 = vsub.f32 %v507, %v1716
  %v1718 = vand.u32 %v1717, 4294901760
  %1719 = vmatprep.subr.mxu0 %v1718
  %v1720 = vand.u32 %v506, 4294901760
  %v1721 = vsub.f32 %v506, %v1720
  %v1722 = vand.u32 %v1721, 4294901760
  %1723 = vmatpush1.msra.mxu0 %v1722
  %v1724 = vand.u32 %v510, 4294901760
  %v1725 = vsub.f32 %v510, %v1724
  %v1726 = vand.u32 %v1725, 4294901760
  %1727 = vmatprep.subr.mxu0 %v1726
  %v1728 = vand.u32 %v509, 4294901760
  %v1729 = vsub.f32 %v509, %v1728
  %v1730 = vand.u32 %v1729, 4294901760
  %1731 = vmatpush1.msra.mxu0 %v1730
  %v1732 = vand.u32 %v513, 4294901760
  %v1733 = vsub.f32 %v513, %v1732
  %v1734 = vand.u32 %v1733, 4294901760
  %1735 = vmatprep.subr.mxu0 %v1734
  %v1736 = vand.u32 %v512, 4294901760
  %v1737 = vsub.f32 %v512, %v1736
  %v1738 = vand.u32 %v1737, 4294901760
  %1739 = vmatpush1.msra.mxu0 %v1738
  %v1740 = vand.u32 %v516, 4294901760
  %v1741 = vsub.f32 %v516, %v1740
  %v1742 = vand.u32 %v1741, 4294901760
  %1743 = vmatprep.subr.mxu0 %v1742
  %v1744 = vand.u32 %v515, 4294901760
  %v1745 = vsub.f32 %v515, %v1744
  %v1746 = vand.u32 %v1745, 4294901760
  %1747 = vmatpush1.msra.mxu0 %v1746
  %v1748 = vand.u32 %v417, 4294901760
  %1749 = vmatprep.mubr.f32.mxu0 %v1748
  %v1750 = vand.u32 %v416, 4294901760
  %1751 = vmatmul.mubr.f32.gmra.mrb[0].mxu0 %v1750
  %v1752 = vpop.f32.mrb[0].mxu0
  %v1753 = vadd.f32 %v1464, %v1752
  %v1754 = vpop.f32.mrb[0].mxu0
  %v1755 = vadd.f32 %v1466, %v1754
  %v1756 = vand.u32 %v419, 4294901760
  %1757 = vmatprep.mubr.f32.mxu0 %v1756
  %v1758 = vand.u32 %v418, 4294901760
  %1759 = vmatmul.mubr.f32.gmra.mrb[0].mxu0 %v1758
  %v1760 = vpop.f32.mrb[0].mxu0
  %v1761 = vadd.f32 %v1476, %v1760
  %v1762 = vpop.f32.mrb[0].mxu0
  %v1763 = vadd.f32 %v1478, %v1762
  %v1764 = vand.u32 %v421, 4294901760
  %1765 = vmatprep.mubr.f32.mxu0 %v1764
  %v1766 = vand.u32 %v420, 4294901760
  %1767 = vmatmul.mubr.f32.gmra.mrb[0].mxu0 %v1766
  %v1768 = vpop.f32.mrb[0].mxu0
  %v1769 = vadd.f32 %v1488, %v1768
  %v1770 = vpop.f32.mrb[0].mxu0
  %v1771 = vadd.f32 %v1490, %v1770
  %1772 = vdwg.mxu0
  %v1773 = vand.u32 %v423, 4294901760
  %1774 = vmatprep.subr.mxu0 %v1773
  %v1775 = vand.u32 %v422, 4294901760
  %1776 = vmatpush1.msra.mxu0 %v1775
  %v1777 = vand.u32 %v426, 4294901760
  %1778 = vmatprep.subr.mxu0 %v1777
  %v1779 = vand.u32 %v425, 4294901760
  %1780 = vmatpush1.msra.mxu0 %v1779
  %v1781 = vand.u32 %v429, 4294901760
  %1782 = vmatprep.subr.mxu0 %v1781
  %v1783 = vand.u32 %v428, 4294901760
  %1784 = vmatpush1.msra.mxu0 %v1783
  %v1785 = vand.u32 %v432, 4294901760
  %1786 = vmatprep.subr.mxu0 %v1785
  %v1787 = vand.u32 %v431, 4294901760
  %1788 = vmatpush1.msra.mxu0 %v1787
  %v1789 = vand.u32 %v435, 4294901760
  %1790 = vmatprep.subr.mxu0 %v1789
  %v1791 = vand.u32 %v434, 4294901760
  %1792 = vmatpush1.msra.mxu0 %v1791
  %v1793 = vand.u32 %v438, 4294901760
  %1794 = vmatprep.subr.mxu0 %v1793
  %v1795 = vand.u32 %v437, 4294901760
  %1796 = vmatpush1.msra.mxu0 %v1795
  %v1797 = vand.u32 %v441, 4294901760
  %1798 = vmatprep.subr.mxu0 %v1797
  %v1799 = vand.u32 %v440, 4294901760
  %1800 = vmatpush1.msra.mxu0 %v1799
  %v1801 = vand.u32 %v444, 4294901760
  %1802 = vmatprep.subr.mxu0 %v1801
  %v1803 = vand.u32 %v443, 4294901760
  %1804 = vmatpush1.msra.mxu0 %v1803
  %v1805 = vand.u32 %v447, 4294901760
  %1806 = vmatprep.subr.mxu0 %v1805
  %v1807 = vand.u32 %v446, 4294901760
  %1808 = vmatpush1.msra.mxu0 %v1807
  %v1809 = vand.u32 %v450, 4294901760
  %1810 = vmatprep.subr.mxu0 %v1809
  %v1811 = vand.u32 %v449, 4294901760
  %1812 = vmatpush1.msra.mxu0 %v1811
  %v1813 = vand.u32 %v453, 4294901760
  %1814 = vmatprep.subr.mxu0 %v1813
  %v1815 = vand.u32 %v452, 4294901760
  %1816 = vmatpush1.msra.mxu0 %v1815
  %v1817 = vand.u32 %v456, 4294901760
  %1818 = vmatprep.subr.mxu0 %v1817
  %v1819 = vand.u32 %v455, 4294901760
  %1820 = vmatpush1.msra.mxu0 %v1819
  %v1821 = vand.u32 %v459, 4294901760
  %1822 = vmatprep.subr.mxu0 %v1821
  %v1823 = vand.u32 %v458, 4294901760
  %1824 = vmatpush1.msra.mxu0 %v1823
  %v1825 = vand.u32 %v462, 4294901760
  %1826 = vmatprep.subr.mxu0 %v1825
  %v1827 = vand.u32 %v461, 4294901760
  %1828 = vmatpush1.msra.mxu0 %v1827
  %v1829 = vand.u32 %v465, 4294901760
  %1830 = vmatprep.subr.mxu0 %v1829
  %v1831 = vand.u32 %v464, 4294901760
  %1832 = vmatpush1.msra.mxu0 %v1831
  %v1833 = vand.u32 %v468, 4294901760
  %1834 = vmatprep.subr.mxu0 %v1833
  %v1835 = vand.u32 %v467, 4294901760
  %1836 = vmatpush1.msra.mxu0 %v1835
  %v1837 = vand.u32 %v471, 4294901760
  %1838 = vmatprep.subr.mxu0 %v1837
  %v1839 = vand.u32 %v470, 4294901760
  %1840 = vmatpush1.msra.mxu0 %v1839
  %v1841 = vand.u32 %v474, 4294901760
  %1842 = vmatprep.subr.mxu0 %v1841
  %v1843 = vand.u32 %v473, 4294901760
  %1844 = vmatpush1.msra.mxu0 %v1843
  %v1845 = vand.u32 %v477, 4294901760
  %1846 = vmatprep.subr.mxu0 %v1845
  %v1847 = vand.u32 %v476, 4294901760
  %1848 = vmatpush1.msra.mxu0 %v1847
  %v1849 = vand.u32 %v480, 4294901760
  %1850 = vmatprep.subr.mxu0 %v1849
  %v1851 = vand.u32 %v479, 4294901760
  %1852 = vmatpush1.msra.mxu0 %v1851
  %v1853 = vand.u32 %v483, 4294901760
  %1854 = vmatprep.subr.mxu0 %v1853
  %v1855 = vand.u32 %v482, 4294901760
  %1856 = vmatpush1.msra.mxu0 %v1855
  %v1857 = vand.u32 %v486, 4294901760
  %1858 = vmatprep.subr.mxu0 %v1857
  %v1859 = vand.u32 %v485, 4294901760
  %1860 = vmatpush1.msra.mxu0 %v1859
  %v1861 = vand.u32 %v489, 4294901760
  %1862 = vmatprep.subr.mxu0 %v1861
  %v1863 = vand.u32 %v488, 4294901760
  %1864 = vmatpush1.msra.mxu0 %v1863
  %v1865 = vand.u32 %v492, 4294901760
  %1866 = vmatprep.subr.mxu0 %v1865
  %v1867 = vand.u32 %v491, 4294901760
  %1868 = vmatpush1.msra.mxu0 %v1867
  %v1869 = vand.u32 %v495, 4294901760
  %1870 = vmatprep.subr.mxu0 %v1869
  %v1871 = vand.u32 %v494, 4294901760
  %1872 = vmatpush1.msra.mxu0 %v1871
  %v1873 = vand.u32 %v498, 4294901760
  %1874 = vmatprep.subr.mxu0 %v1873
  %v1875 = vand.u32 %v497, 4294901760
  %1876 = vmatpush1.msra.mxu0 %v1875
  %v1877 = vand.u32 %v501, 4294901760
  %1878 = vmatprep.subr.mxu0 %v1877
  %v1879 = vand.u32 %v500, 4294901760
  %1880 = vmatpush1.msra.mxu0 %v1879
  %v1881 = vand.u32 %v504, 4294901760
  %1882 = vmatprep.subr.mxu0 %v1881
  %v1883 = vand.u32 %v503, 4294901760
  %1884 = vmatpush1.msra.mxu0 %v1883
  %v1885 = vand.u32 %v507, 4294901760
  %1886 = vmatprep.subr.mxu0 %v1885
  %v1887 = vand.u32 %v506, 4294901760
  %1888 = vmatpush1.msra.mxu0 %v1887
  %v1889 = vand.u32 %v510, 4294901760
  %1890 = vmatprep.subr.mxu0 %v1889
  %v1891 = vand.u32 %v509, 4294901760
  %1892 = vmatpush1.msra.mxu0 %v1891
  %v1893 = vand.u32 %v513, 4294901760
  %1894 = vmatprep.subr.mxu0 %v1893
  %v1895 = vand.u32 %v512, 4294901760
  %1896 = vmatpush1.msra.mxu0 %v1895
  %v1897 = vand.u32 %v516, 4294901760
  %1898 = vmatprep.subr.mxu0 %v1897
  %v1899 = vand.u32 %v515, 4294901760
  %1900 = vmatpush1.msra.mxu0 %v1899
  %v1901 = vand.u32 %v417, 4294901760
  %1902 = vmatprep.mubr.f32.mxu0 %v1901
  %v1903 = vand.u32 %v416, 4294901760
  %1904 = vmatmul.mubr.f32.gmra.mrb[0].mxu0 %v1903
  %v1905 = vpop.f32.mrb[0].mxu0
  %v1906 = vadd.f32 %v1753, %v1905
  %v1907 = vpop.f32.mrb[0].mxu0
  %v1908 = vadd.f32 %v1755, %v1907
  %v1909 = vand.u32 %v419, 4294901760
  %1910 = vmatprep.mubr.f32.mxu0 %v1909
  %v1911 = vand.u32 %v418, 4294901760
  %1912 = vmatmul.mubr.f32.gmra.mrb[0].mxu0 %v1911
  %v1913 = vpop.f32.mrb[0].mxu0
  %v1914 = vadd.f32 %v1761, %v1913
  %v1915 = vpop.f32.mrb[0].mxu0
  %v1916 = vadd.f32 %v1763, %v1915
  %v1917 = vand.u32 %v421, 4294901760
  %1918 = vmatprep.mubr.f32.mxu0 %v1917
  %v1919 = vand.u32 %v420, 4294901760
  %1920 = vmatmul.mubr.f32.gmra.mrb[0].mxu0 %v1919
  %v1921 = vpop.f32.mrb[0].mxu0
  %v1922 = vadd.f32 %v1769, %v1921
  %v1923 = vpop.f32.mrb[0].mxu0
  %v1924 = vadd.f32 %v1771, %v1923
  %1925 = vdwg.mxu0
  %1926 = vmatprep.subr.mxu0 0.0
  %v1927 = vand.u32 %v424, 4294901760
  %1928 = vmatpush1.msra.mxu0 %v1927
  %1929 = vmatprep.subr.mxu0 0.0
  %v1930 = vand.u32 %v427, 4294901760
  %1931 = vmatpush1.msra.mxu0 %v1930
  %1932 = vmatprep.subr.mxu0 0.0
  %v1933 = vand.u32 %v430, 4294901760
  %1934 = vmatpush1.msra.mxu0 %v1933
  %1935 = vmatprep.subr.mxu0 0.0
  %v1936 = vand.u32 %v433, 4294901760
  %1937 = vmatpush1.msra.mxu0 %v1936
  %1938 = vmatprep.subr.mxu0 0.0
  %v1939 = vand.u32 %v436, 4294901760
  %1940 = vmatpush1.msra.mxu0 %v1939
  %1941 = vmatprep.subr.mxu0 0.0
  %v1942 = vand.u32 %v439, 4294901760
  %1943 = vmatpush1.msra.mxu0 %v1942
  %1944 = vmatprep.subr.mxu0 0.0
  %v1945 = vand.u32 %v442, 4294901760
  %1946 = vmatpush1.msra.mxu0 %v1945
  %1947 = vmatprep.subr.mxu0 0.0
  %v1948 = vand.u32 %v445, 4294901760
  %1949 = vmatpush1.msra.mxu0 %v1948
  %1950 = vmatprep.subr.mxu0 0.0
  %v1951 = vand.u32 %v448, 4294901760
  %1952 = vmatpush1.msra.mxu0 %v1951
  %1953 = vmatprep.subr.mxu0 0.0
  %v1954 = vand.u32 %v451, 4294901760
  %1955 = vmatpush1.msra.mxu0 %v1954
  %1956 = vmatprep.subr.mxu0 0.0
  %v1957 = vand.u32 %v454, 4294901760
  %1958 = vmatpush1.msra.mxu0 %v1957
  %1959 = vmatprep.subr.mxu0 0.0
  %v1960 = vand.u32 %v457, 4294901760
  %1961 = vmatpush1.msra.mxu0 %v1960
  %1962 = vmatprep.subr.mxu0 0.0
  %v1963 = vand.u32 %v460, 4294901760
  %1964 = vmatpush1.msra.mxu0 %v1963
  %1965 = vmatprep.subr.mxu0 0.0
  %v1966 = vand.u32 %v463, 4294901760
  %1967 = vmatpush1.msra.mxu0 %v1966
  %1968 = vmatprep.subr.mxu0 0.0
  %v1969 = vand.u32 %v466, 4294901760
  %1970 = vmatpush1.msra.mxu0 %v1969
  %1971 = vmatprep.subr.mxu0 0.0
  %v1972 = vand.u32 %v469, 4294901760
  %1973 = vmatpush1.msra.mxu0 %v1972
  %1974 = vmatprep.subr.mxu0 0.0
  %v1975 = vand.u32 %v472, 4294901760
  %1976 = vmatpush1.msra.mxu0 %v1975
  %1977 = vmatprep.subr.mxu0 0.0
  %v1978 = vand.u32 %v475, 4294901760
  %1979 = vmatpush1.msra.mxu0 %v1978
  %1980 = vmatprep.subr.mxu0 0.0
  %v1981 = vand.u32 %v478, 4294901760
  %1982 = vmatpush1.msra.mxu0 %v1981
  %1983 = vmatprep.subr.mxu0 0.0
  %v1984 = vand.u32 %v481, 4294901760
  %1985 = vmatpush1.msra.mxu0 %v1984
  %1986 = vmatprep.subr.mxu0 0.0
  %v1987 = vand.u32 %v484, 4294901760
  %1988 = vmatpush1.msra.mxu0 %v1987
  %1989 = vmatprep.subr.mxu0 0.0
  %v1990 = vand.u32 %v487, 4294901760
  %1991 = vmatpush1.msra.mxu0 %v1990
  %1992 = vmatprep.subr.mxu0 0.0
  %v1993 = vand.u32 %v490, 4294901760
  %1994 = vmatpush1.msra.mxu0 %v1993
  %1995 = vmatprep.subr.mxu0 0.0
  %v1996 = vand.u32 %v493, 4294901760
  %1997 = vmatpush1.msra.mxu0 %v1996
  %1998 = vmatprep.subr.mxu0 0.0
  %v1999 = vand.u32 %v496, 4294901760
  %2000 = vmatpush1.msra.mxu0 %v1999
  %2001 = vmatprep.subr.mxu0 0.0
  %v2002 = vand.u32 %v499, 4294901760
  %2003 = vmatpush1.msra.mxu0 %v2002
  %2004 = vmatprep.subr.mxu0 0.0
  %v2005 = vand.u32 %v502, 4294901760
  %2006 = vmatpush1.msra.mxu0 %v2005
  %2007 = vmatprep.subr.mxu0 0.0
  %v2008 = vand.u32 %v505, 4294901760
  %2009 = vmatpush1.msra.mxu0 %v2008
  %2010 = vmatprep.subr.mxu0 0.0
  %v2011 = vand.u32 %v508, 4294901760
  %2012 = vmatpush1.msra.mxu0 %v2011
  %2013 = vmatprep.subr.mxu0 0.0
  %v2014 = vand.u32 %v511, 4294901760
  %2015 = vmatpush1.msra.mxu0 %v2014
  %2016 = vmatprep.subr.mxu0 0.0
  %v2017 = vand.u32 %v514, 4294901760
  %2018 = vmatpush1.msra.mxu0 %v2017
  %2019 = vmatprep.subr.mxu0 0.0
  %v2020 = vand.u32 %v517, 4294901760
  %2021 = vmatpush1.msra.mxu0 %v2020
  %v2022 = vand.u32 %v417, 4294901760
  %v2023 = vsub.f32 %v417, %v2022
  %v2024 = vand.u32 %v2023, 4294901760
  %v2025 = vsub.f32 %v2023, %v2024
  %v2026 = vand.u32 %v2025, 4294901760
  %2027 = vmatprep.mubr.f32.mxu0 %v2026
  %v2028 = vand.u32 %v416, 4294901760
  %v2029 = vsub.f32 %v416, %v2028
  %v2030 = vand.u32 %v2029, 4294901760
  %v2031 = vsub.f32 %v2029, %v2030
  %v2032 = vand.u32 %v2031, 4294901760
  %2033 = vmatmul.mubr.f32.gmra.mrb[0].mxu0 %v2032
  %v2034 = vpop.f32.mrb[0].mxu0
  %v2035 = vadd.f32 0.0, %v2034
  %v2036 = vpop.f32.mrb[0].mxu0
  %v2037 = vand.u32 %v419, 4294901760
  %v2038 = vsub.f32 %v419, %v2037
  %v2039 = vand.u32 %v2038, 4294901760
  %v2040 = vsub.f32 %v2038, %v2039
  %v2041 = vand.u32 %v2040, 4294901760
  %2042 = vmatprep.mubr.f32.mxu0 %v2041
  %v2043 = vand.u32 %v418, 4294901760
  %v2044 = vsub.f32 %v418, %v2043
  %v2045 = vand.u32 %v2044, 4294901760
  %v2046 = vsub.f32 %v2044, %v2045
  %v2047 = vand.u32 %v2046, 4294901760
  %2048 = vmatmul.mubr.f32.gmra.mrb[0].mxu0 %v2047
  %v2049 = vpop.f32.mrb[0].mxu0
  %v2050 = vadd.f32 0.0, %v2049
  %v2051 = vpop.f32.mrb[0].mxu0
  %v2052 = vand.u32 %v421, 4294901760
  %v2053 = vsub.f32 %v421, %v2052
  %v2054 = vand.u32 %v2053, 4294901760
  %v2055 = vsub.f32 %v2053, %v2054
  %v2056 = vand.u32 %v2055, 4294901760
  %2057 = vmatprep.mubr.f32.mxu0 %v2056
  %v2058 = vand.u32 %v420, 4294901760
  %v2059 = vsub.f32 %v420, %v2058
  %v2060 = vand.u32 %v2059, 4294901760
  %v2061 = vsub.f32 %v2059, %v2060
  %v2062 = vand.u32 %v2061, 4294901760
  %2063 = vmatmul.mubr.f32.gmra.mrb[0].mxu0 %v2062
  %v2064 = vpop.f32.mrb[0].mxu0
  %v2065 = vadd.f32 0.0, %v2064
  %v2066 = vpop.f32.mrb[0].mxu0
  %2067 = vdwg.mxu0
  %2068 = vmatprep.subr.mxu0 0.0
  %v2069 = vand.u32 %v424, 4294901760
  %v2070 = vsub.f32 %v424, %v2069
  %v2071 = vand.u32 %v2070, 4294901760
  %v2072 = vsub.f32 %v2070, %v2071
  %v2073 = vand.u32 %v2072, 4294901760
  %2074 = vmatpush1.msra.mxu0 %v2073
  %2075 = vmatprep.subr.mxu0 0.0
  %v2076 = vand.u32 %v427, 4294901760
  %v2077 = vsub.f32 %v427, %v2076
  %v2078 = vand.u32 %v2077, 4294901760
  %v2079 = vsub.f32 %v2077, %v2078
  %v2080 = vand.u32 %v2079, 4294901760
  %2081 = vmatpush1.msra.mxu0 %v2080
  %2082 = vmatprep.subr.mxu0 0.0
  %v2083 = vand.u32 %v430, 4294901760
  %v2084 = vsub.f32 %v430, %v2083
  %v2085 = vand.u32 %v2084, 4294901760
  %v2086 = vsub.f32 %v2084, %v2085
  %v2087 = vand.u32 %v2086, 4294901760
  %2088 = vmatpush1.msra.mxu0 %v2087
  %2089 = vmatprep.subr.mxu0 0.0
  %v2090 = vand.u32 %v433, 4294901760
  %v2091 = vsub.f32 %v433, %v2090
  %v2092 = vand.u32 %v2091, 4294901760
  %v2093 = vsub.f32 %v2091, %v2092
  %v2094 = vand.u32 %v2093, 4294901760
  %2095 = vmatpush1.msra.mxu0 %v2094
  %2096 = vmatprep.subr.mxu0 0.0
  %v2097 = vand.u32 %v436, 4294901760
  %v2098 = vsub.f32 %v436, %v2097
  %v2099 = vand.u32 %v2098, 4294901760
  %v2100 = vsub.f32 %v2098, %v2099
  %v2101 = vand.u32 %v2100, 4294901760
  %2102 = vmatpush1.msra.mxu0 %v2101
  %2103 = vmatprep.subr.mxu0 0.0
  %v2104 = vand.u32 %v439, 4294901760
  %v2105 = vsub.f32 %v439, %v2104
  %v2106 = vand.u32 %v2105, 4294901760
  %v2107 = vsub.f32 %v2105, %v2106
  %v2108 = vand.u32 %v2107, 4294901760
  %2109 = vmatpush1.msra.mxu0 %v2108
  %2110 = vmatprep.subr.mxu0 0.0
  %v2111 = vand.u32 %v442, 4294901760
  %v2112 = vsub.f32 %v442, %v2111
  %v2113 = vand.u32 %v2112, 4294901760
  %v2114 = vsub.f32 %v2112, %v2113
  %v2115 = vand.u32 %v2114, 4294901760
  %2116 = vmatpush1.msra.mxu0 %v2115
  %2117 = vmatprep.subr.mxu0 0.0
  %v2118 = vand.u32 %v445, 4294901760
  %v2119 = vsub.f32 %v445, %v2118
  %v2120 = vand.u32 %v2119, 4294901760
  %v2121 = vsub.f32 %v2119, %v2120
  %v2122 = vand.u32 %v2121, 4294901760
  %2123 = vmatpush1.msra.mxu0 %v2122
  %2124 = vmatprep.subr.mxu0 0.0
  %v2125 = vand.u32 %v448, 4294901760
  %v2126 = vsub.f32 %v448, %v2125
  %v2127 = vand.u32 %v2126, 4294901760
  %v2128 = vsub.f32 %v2126, %v2127
  %v2129 = vand.u32 %v2128, 4294901760
  %2130 = vmatpush1.msra.mxu0 %v2129
  %2131 = vmatprep.subr.mxu0 0.0
  %v2132 = vand.u32 %v451, 4294901760
  %v2133 = vsub.f32 %v451, %v2132
  %v2134 = vand.u32 %v2133, 4294901760
  %v2135 = vsub.f32 %v2133, %v2134
  %v2136 = vand.u32 %v2135, 4294901760
  %2137 = vmatpush1.msra.mxu0 %v2136
  %2138 = vmatprep.subr.mxu0 0.0
  %v2139 = vand.u32 %v454, 4294901760
  %v2140 = vsub.f32 %v454, %v2139
  %v2141 = vand.u32 %v2140, 4294901760
  %v2142 = vsub.f32 %v2140, %v2141
  %v2143 = vand.u32 %v2142, 4294901760
  %2144 = vmatpush1.msra.mxu0 %v2143
  %2145 = vmatprep.subr.mxu0 0.0
  %v2146 = vand.u32 %v457, 4294901760
  %v2147 = vsub.f32 %v457, %v2146
  %v2148 = vand.u32 %v2147, 4294901760
  %v2149 = vsub.f32 %v2147, %v2148
  %v2150 = vand.u32 %v2149, 4294901760
  %2151 = vmatpush1.msra.mxu0 %v2150
  %2152 = vmatprep.subr.mxu0 0.0
  %v2153 = vand.u32 %v460, 4294901760
  %v2154 = vsub.f32 %v460, %v2153
  %v2155 = vand.u32 %v2154, 4294901760
  %v2156 = vsub.f32 %v2154, %v2155
  %v2157 = vand.u32 %v2156, 4294901760
  %2158 = vmatpush1.msra.mxu0 %v2157
  %2159 = vmatprep.subr.mxu0 0.0
  %v2160 = vand.u32 %v463, 4294901760
  %v2161 = vsub.f32 %v463, %v2160
  %v2162 = vand.u32 %v2161, 4294901760
  %v2163 = vsub.f32 %v2161, %v2162
  %v2164 = vand.u32 %v2163, 4294901760
  %2165 = vmatpush1.msra.mxu0 %v2164
  %2166 = vmatprep.subr.mxu0 0.0
  %v2167 = vand.u32 %v466, 4294901760
  %v2168 = vsub.f32 %v466, %v2167
  %v2169 = vand.u32 %v2168, 4294901760
  %v2170 = vsub.f32 %v2168, %v2169
  %v2171 = vand.u32 %v2170, 4294901760
  %2172 = vmatpush1.msra.mxu0 %v2171
  %2173 = vmatprep.subr.mxu0 0.0
  %v2174 = vand.u32 %v469, 4294901760
  %v2175 = vsub.f32 %v469, %v2174
  %v2176 = vand.u32 %v2175, 4294901760
  %v2177 = vsub.f32 %v2175, %v2176
  %v2178 = vand.u32 %v2177, 4294901760
  %2179 = vmatpush1.msra.mxu0 %v2178
  %2180 = vmatprep.subr.mxu0 0.0
  %v2181 = vand.u32 %v472, 4294901760
  %v2182 = vsub.f32 %v472, %v2181
  %v2183 = vand.u32 %v2182, 4294901760
  %v2184 = vsub.f32 %v2182, %v2183
  %v2185 = vand.u32 %v2184, 4294901760
  %2186 = vmatpush1.msra.mxu0 %v2185
  %2187 = vmatprep.subr.mxu0 0.0
  %v2188 = vand.u32 %v475, 4294901760
  %v2189 = vsub.f32 %v475, %v2188
  %v2190 = vand.u32 %v2189, 4294901760
  %v2191 = vsub.f32 %v2189, %v2190
  %v2192 = vand.u32 %v2191, 4294901760
  %2193 = vmatpush1.msra.mxu0 %v2192
  %2194 = vmatprep.subr.mxu0 0.0
  %v2195 = vand.u32 %v478, 4294901760
  %v2196 = vsub.f32 %v478, %v2195
  %v2197 = vand.u32 %v2196, 4294901760
  %v2198 = vsub.f32 %v2196, %v2197
  %v2199 = vand.u32 %v2198, 4294901760
  %2200 = vmatpush1.msra.mxu0 %v2199
  %2201 = vmatprep.subr.mxu0 0.0
  %v2202 = vand.u32 %v481, 4294901760
  %v2203 = vsub.f32 %v481, %v2202
  %v2204 = vand.u32 %v2203, 4294901760
  %v2205 = vsub.f32 %v2203, %v2204
  %v2206 = vand.u32 %v2205, 4294901760
  %2207 = vmatpush1.msra.mxu0 %v2206
  %2208 = vmatprep.subr.mxu0 0.0
  %v2209 = vand.u32 %v484, 4294901760
  %v2210 = vsub.f32 %v484, %v2209
  %v2211 = vand.u32 %v2210, 4294901760
  %v2212 = vsub.f32 %v2210, %v2211
  %v2213 = vand.u32 %v2212, 4294901760
  %2214 = vmatpush1.msra.mxu0 %v2213
  %2215 = vmatprep.subr.mxu0 0.0
  %v2216 = vand.u32 %v487, 4294901760
  %v2217 = vsub.f32 %v487, %v2216
  %v2218 = vand.u32 %v2217, 4294901760
  %v2219 = vsub.f32 %v2217, %v2218
  %v2220 = vand.u32 %v2219, 4294901760
  %2221 = vmatpush1.msra.mxu0 %v2220
  %2222 = vmatprep.subr.mxu0 0.0
  %v2223 = vand.u32 %v490, 4294901760
  %v2224 = vsub.f32 %v490, %v2223
  %v2225 = vand.u32 %v2224, 4294901760
  %v2226 = vsub.f32 %v2224, %v2225
  %v2227 = vand.u32 %v2226, 4294901760
  %2228 = vmatpush1.msra.mxu0 %v2227
  %2229 = vmatprep.subr.mxu0 0.0
  %v2230 = vand.u32 %v493, 4294901760
  %v2231 = vsub.f32 %v493, %v2230
  %v2232 = vand.u32 %v2231, 4294901760
  %v2233 = vsub.f32 %v2231, %v2232
  %v2234 = vand.u32 %v2233, 4294901760
  %2235 = vmatpush1.msra.mxu0 %v2234
  %2236 = vmatprep.subr.mxu0 0.0
  %v2237 = vand.u32 %v496, 4294901760
  %v2238 = vsub.f32 %v496, %v2237
  %v2239 = vand.u32 %v2238, 4294901760
  %v2240 = vsub.f32 %v2238, %v2239
  %v2241 = vand.u32 %v2240, 4294901760
  %2242 = vmatpush1.msra.mxu0 %v2241
  %2243 = vmatprep.subr.mxu0 0.0
  %v2244 = vand.u32 %v499, 4294901760
  %v2245 = vsub.f32 %v499, %v2244
  %v2246 = vand.u32 %v2245, 4294901760
  %v2247 = vsub.f32 %v2245, %v2246
  %v2248 = vand.u32 %v2247, 4294901760
  %2249 = vmatpush1.msra.mxu0 %v2248
  %2250 = vmatprep.subr.mxu0 0.0
  %v2251 = vand.u32 %v502, 4294901760
  %v2252 = vsub.f32 %v502, %v2251
  %v2253 = vand.u32 %v2252, 4294901760
  %v2254 = vsub.f32 %v2252, %v2253
  %v2255 = vand.u32 %v2254, 4294901760
  %2256 = vmatpush1.msra.mxu0 %v2255
  %2257 = vmatprep.subr.mxu0 0.0
  %v2258 = vand.u32 %v505, 4294901760
  %v2259 = vsub.f32 %v505, %v2258
  %v2260 = vand.u32 %v2259, 4294901760
  %v2261 = vsub.f32 %v2259, %v2260
  %v2262 = vand.u32 %v2261, 4294901760
  %2263 = vmatpush1.msra.mxu0 %v2262
  %2264 = vmatprep.subr.mxu0 0.0
  %v2265 = vand.u32 %v508, 4294901760
  %v2266 = vsub.f32 %v508, %v2265
  %v2267 = vand.u32 %v2266, 4294901760
  %v2268 = vsub.f32 %v2266, %v2267
  %v2269 = vand.u32 %v2268, 4294901760
  %2270 = vmatpush1.msra.mxu0 %v2269
  %2271 = vmatprep.subr.mxu0 0.0
  %v2272 = vand.u32 %v511, 4294901760
  %v2273 = vsub.f32 %v511, %v2272
  %v2274 = vand.u32 %v2273, 4294901760
  %v2275 = vsub.f32 %v2273, %v2274
  %v2276 = vand.u32 %v2275, 4294901760
  %2277 = vmatpush1.msra.mxu0 %v2276
  %2278 = vmatprep.subr.mxu0 0.0
  %v2279 = vand.u32 %v514, 4294901760
  %v2280 = vsub.f32 %v514, %v2279
  %v2281 = vand.u32 %v2280, 4294901760
  %v2282 = vsub.f32 %v2280, %v2281
  %v2283 = vand.u32 %v2282, 4294901760
  %2284 = vmatpush1.msra.mxu0 %v2283
  %2285 = vmatprep.subr.mxu0 0.0
  %v2286 = vand.u32 %v517, 4294901760
  %v2287 = vsub.f32 %v517, %v2286
  %v2288 = vand.u32 %v2287, 4294901760
  %v2289 = vsub.f32 %v2287, %v2288
  %v2290 = vand.u32 %v2289, 4294901760
  %2291 = vmatpush1.msra.mxu0 %v2290
  %v2292 = vand.u32 %v417, 4294901760
  %2293 = vmatprep.mubr.f32.mxu0 %v2292
  %v2294 = vand.u32 %v416, 4294901760
  %2295 = vmatmul.mubr.f32.gmra.mrb[0].mxu0 %v2294
  %v2296 = vpop.f32.mrb[0].mxu0
  %v2297 = vadd.f32 %v2035, %v2296
  %v2298 = vpop.f32.mrb[0].mxu0
  %v2299 = vand.u32 %v419, 4294901760
  %2300 = vmatprep.mubr.f32.mxu0 %v2299
  %v2301 = vand.u32 %v418, 4294901760
  %2302 = vmatmul.mubr.f32.gmra.mrb[0].mxu0 %v2301
  %v2303 = vpop.f32.mrb[0].mxu0
  %v2304 = vadd.f32 %v2050, %v2303
  %v2305 = vpop.f32.mrb[0].mxu0
  %v2306 = vand.u32 %v421, 4294901760
  %2307 = vmatprep.mubr.f32.mxu0 %v2306
  %v2308 = vand.u32 %v420, 4294901760
  %2309 = vmatmul.mubr.f32.gmra.mrb[0].mxu0 %v2308
  %v2310 = vpop.f32.mrb[0].mxu0
  %v2311 = vadd.f32 %v2065, %v2310
  %v2312 = vpop.f32.mrb[0].mxu0
  %2313 = vdwg.mxu0
  %2314 = vmatprep.subr.mxu0 0.0
  %v2315 = vand.u32 %v424, 4294901760
  %v2316 = vsub.f32 %v424, %v2315
  %2317 = vmatpush1.msra.mxu0 %v2316
  %2318 = vmatprep.subr.mxu0 0.0
  %v2319 = vand.u32 %v427, 4294901760
  %v2320 = vsub.f32 %v427, %v2319
  %2321 = vmatpush1.msra.mxu0 %v2320
  %2322 = vmatprep.subr.mxu0 0.0
  %v2323 = vand.u32 %v430, 4294901760
  %v2324 = vsub.f32 %v430, %v2323
  %2325 = vmatpush1.msra.mxu0 %v2324
  %2326 = vmatprep.subr.mxu0 0.0
  %v2327 = vand.u32 %v433, 4294901760
  %v2328 = vsub.f32 %v433, %v2327
  %2329 = vmatpush1.msra.mxu0 %v2328
  %2330 = vmatprep.subr.mxu0 0.0
  %v2331 = vand.u32 %v436, 4294901760
  %v2332 = vsub.f32 %v436, %v2331
  %2333 = vmatpush1.msra.mxu0 %v2332
  %2334 = vmatprep.subr.mxu0 0.0
  %v2335 = vand.u32 %v439, 4294901760
  %v2336 = vsub.f32 %v439, %v2335
  %2337 = vmatpush1.msra.mxu0 %v2336
  %2338 = vmatprep.subr.mxu0 0.0
  %v2339 = vand.u32 %v442, 4294901760
  %v2340 = vsub.f32 %v442, %v2339
  %2341 = vmatpush1.msra.mxu0 %v2340
  %2342 = vmatprep.subr.mxu0 0.0
  %v2343 = vand.u32 %v445, 4294901760
  %v2344 = vsub.f32 %v445, %v2343
  %2345 = vmatpush1.msra.mxu0 %v2344
  %2346 = vmatprep.subr.mxu0 0.0
  %v2347 = vand.u32 %v448, 4294901760
  %v2348 = vsub.f32 %v448, %v2347
  %2349 = vmatpush1.msra.mxu0 %v2348
  %2350 = vmatprep.subr.mxu0 0.0
  %v2351 = vand.u32 %v451, 4294901760
  %v2352 = vsub.f32 %v451, %v2351
  %2353 = vmatpush1.msra.mxu0 %v2352
  %2354 = vmatprep.subr.mxu0 0.0
  %v2355 = vand.u32 %v454, 4294901760
  %v2356 = vsub.f32 %v454, %v2355
  %2357 = vmatpush1.msra.mxu0 %v2356
  %2358 = vmatprep.subr.mxu0 0.0
  %v2359 = vand.u32 %v457, 4294901760
  %v2360 = vsub.f32 %v457, %v2359
  %2361 = vmatpush1.msra.mxu0 %v2360
  %2362 = vmatprep.subr.mxu0 0.0
  %v2363 = vand.u32 %v460, 4294901760
  %v2364 = vsub.f32 %v460, %v2363
  %2365 = vmatpush1.msra.mxu0 %v2364
  %2366 = vmatprep.subr.mxu0 0.0
  %v2367 = vand.u32 %v463, 4294901760
  %v2368 = vsub.f32 %v463, %v2367
  %2369 = vmatpush1.msra.mxu0 %v2368
  %2370 = vmatprep.subr.mxu0 0.0
  %v2371 = vand.u32 %v466, 4294901760
  %v2372 = vsub.f32 %v466, %v2371
  %2373 = vmatpush1.msra.mxu0 %v2372
  %2374 = vmatprep.subr.mxu0 0.0
  %v2375 = vand.u32 %v469, 4294901760
  %v2376 = vsub.f32 %v469, %v2375
  %2377 = vmatpush1.msra.mxu0 %v2376
  %2378 = vmatprep.subr.mxu0 0.0
  %v2379 = vand.u32 %v472, 4294901760
  %v2380 = vsub.f32 %v472, %v2379
  %2381 = vmatpush1.msra.mxu0 %v2380
  %2382 = vmatprep.subr.mxu0 0.0
  %v2383 = vand.u32 %v475, 4294901760
  %v2384 = vsub.f32 %v475, %v2383
  %2385 = vmatpush1.msra.mxu0 %v2384
  %2386 = vmatprep.subr.mxu0 0.0
  %v2387 = vand.u32 %v478, 4294901760
  %v2388 = vsub.f32 %v478, %v2387
  %2389 = vmatpush1.msra.mxu0 %v2388
  %2390 = vmatprep.subr.mxu0 0.0
  %v2391 = vand.u32 %v481, 4294901760
  %v2392 = vsub.f32 %v481, %v2391
  %2393 = vmatpush1.msra.mxu0 %v2392
  %2394 = vmatprep.subr.mxu0 0.0
  %v2395 = vand.u32 %v484, 4294901760
  %v2396 = vsub.f32 %v484, %v2395
  %2397 = vmatpush1.msra.mxu0 %v2396
  %2398 = vmatprep.subr.mxu0 0.0
  %v2399 = vand.u32 %v487, 4294901760
  %v2400 = vsub.f32 %v487, %v2399
  %2401 = vmatpush1.msra.mxu0 %v2400
  %2402 = vmatprep.subr.mxu0 0.0
  %v2403 = vand.u32 %v490, 4294901760
  %v2404 = vsub.f32 %v490, %v2403
  %2405 = vmatpush1.msra.mxu0 %v2404
  %2406 = vmatprep.subr.mxu0 0.0
  %v2407 = vand.u32 %v493, 4294901760
  %v2408 = vsub.f32 %v493, %v2407
  %2409 = vmatpush1.msra.mxu0 %v2408
  %2410 = vmatprep.subr.mxu0 0.0
  %v2411 = vand.u32 %v496, 4294901760
  %v2412 = vsub.f32 %v496, %v2411
  %2413 = vmatpush1.msra.mxu0 %v2412
  %2414 = vmatprep.subr.mxu0 0.0
  %v2415 = vand.u32 %v499, 4294901760
  %v2416 = vsub.f32 %v499, %v2415
  %2417 = vmatpush1.msra.mxu0 %v2416
  %2418 = vmatprep.subr.mxu0 0.0
  %v2419 = vand.u32 %v502, 4294901760
  %v2420 = vsub.f32 %v502, %v2419
  %2421 = vmatpush1.msra.mxu0 %v2420
  %2422 = vmatprep.subr.mxu0 0.0
  %v2423 = vand.u32 %v505, 4294901760
  %v2424 = vsub.f32 %v505, %v2423
  %2425 = vmatpush1.msra.mxu0 %v2424
  %2426 = vmatprep.subr.mxu0 0.0
  %v2427 = vand.u32 %v508, 4294901760
  %v2428 = vsub.f32 %v508, %v2427
  %2429 = vmatpush1.msra.mxu0 %v2428
  %2430 = vmatprep.subr.mxu0 0.0
  %v2431 = vand.u32 %v511, 4294901760
  %v2432 = vsub.f32 %v511, %v2431
  %2433 = vmatpush1.msra.mxu0 %v2432
  %2434 = vmatprep.subr.mxu0 0.0
  %v2435 = vand.u32 %v514, 4294901760
  %v2436 = vsub.f32 %v514, %v2435
  %2437 = vmatpush1.msra.mxu0 %v2436
  %2438 = vmatprep.subr.mxu0 0.0
  %v2439 = vand.u32 %v517, 4294901760
  %v2440 = vsub.f32 %v517, %v2439
  %2441 = vmatpush1.msra.mxu0 %v2440
  %v2442 = vand.u32 %v417, 4294901760
  %v2443 = vsub.f32 %v417, %v2442
  %2444 = vmatprep.mubr.f32.mxu0 %v2443
  %v2445 = vand.u32 %v416, 4294901760
  %v2446 = vsub.f32 %v416, %v2445
  %2447 = vmatmul.mubr.f32.gmra.mrb[0].mxu0 %v2446
  %v2448 = vpop.f32.mrb[0].mxu0
  %v2449 = vadd.f32 %v2297, %v2448
  %v2450 = vpop.f32.mrb[0].mxu0
  %v2451 = vand.u32 %v419, 4294901760
  %v2452 = vsub.f32 %v419, %v2451
  %2453 = vmatprep.mubr.f32.mxu0 %v2452
  %v2454 = vand.u32 %v418, 4294901760
  %v2455 = vsub.f32 %v418, %v2454
  %2456 = vmatmul.mubr.f32.gmra.mrb[0].mxu0 %v2455
  %v2457 = vpop.f32.mrb[0].mxu0
  %v2458 = vadd.f32 %v2304, %v2457
  %v2459 = vpop.f32.mrb[0].mxu0
  %v2460 = vand.u32 %v421, 4294901760
  %v2461 = vsub.f32 %v421, %v2460
  %2462 = vmatprep.mubr.f32.mxu0 %v2461
  %v2463 = vand.u32 %v420, 4294901760
  %v2464 = vsub.f32 %v420, %v2463
  %2465 = vmatmul.mubr.f32.gmra.mrb[0].mxu0 %v2464
  %v2466 = vpop.f32.mrb[0].mxu0
  %v2467 = vadd.f32 %v2311, %v2466
  %v2468 = vpop.f32.mrb[0].mxu0
  %2469 = vdwg.mxu0
  %2470 = vmatprep.subr.mxu0 0.0
  %v2471 = vand.u32 %v424, 4294901760
  %2472 = vmatpush1.msra.mxu0 %v2471
  %2473 = vmatprep.subr.mxu0 0.0
  %v2474 = vand.u32 %v427, 4294901760
  %2475 = vmatpush1.msra.mxu0 %v2474
  %2476 = vmatprep.subr.mxu0 0.0
  %v2477 = vand.u32 %v430, 4294901760
  %2478 = vmatpush1.msra.mxu0 %v2477
  %2479 = vmatprep.subr.mxu0 0.0
  %v2480 = vand.u32 %v433, 4294901760
  %2481 = vmatpush1.msra.mxu0 %v2480
  %2482 = vmatprep.subr.mxu0 0.0
  %v2483 = vand.u32 %v436, 4294901760
  %2484 = vmatpush1.msra.mxu0 %v2483
  %2485 = vmatprep.subr.mxu0 0.0
  %v2486 = vand.u32 %v439, 4294901760
  %2487 = vmatpush1.msra.mxu0 %v2486
  %2488 = vmatprep.subr.mxu0 0.0
  %v2489 = vand.u32 %v442, 4294901760
  %2490 = vmatpush1.msra.mxu0 %v2489
  %2491 = vmatprep.subr.mxu0 0.0
  %v2492 = vand.u32 %v445, 4294901760
  %2493 = vmatpush1.msra.mxu0 %v2492
  %2494 = vmatprep.subr.mxu0 0.0
  %v2495 = vand.u32 %v448, 4294901760
  %2496 = vmatpush1.msra.mxu0 %v2495
  %2497 = vmatprep.subr.mxu0 0.0
  %v2498 = vand.u32 %v451, 4294901760
  %2499 = vmatpush1.msra.mxu0 %v2498
  %2500 = vmatprep.subr.mxu0 0.0
  %v2501 = vand.u32 %v454, 4294901760
  %2502 = vmatpush1.msra.mxu0 %v2501
  %2503 = vmatprep.subr.mxu0 0.0
  %v2504 = vand.u32 %v457, 4294901760
  %2505 = vmatpush1.msra.mxu0 %v2504
  %2506 = vmatprep.subr.mxu0 0.0
  %v2507 = vand.u32 %v460, 4294901760
  %2508 = vmatpush1.msra.mxu0 %v2507
  %2509 = vmatprep.subr.mxu0 0.0
  %v2510 = vand.u32 %v463, 4294901760
  %2511 = vmatpush1.msra.mxu0 %v2510
  %2512 = vmatprep.subr.mxu0 0.0
  %v2513 = vand.u32 %v466, 4294901760
  %2514 = vmatpush1.msra.mxu0 %v2513
  %2515 = vmatprep.subr.mxu0 0.0
  %v2516 = vand.u32 %v469, 4294901760
  %2517 = vmatpush1.msra.mxu0 %v2516
  %2518 = vmatprep.subr.mxu0 0.0
  %v2519 = vand.u32 %v472, 4294901760
  %2520 = vmatpush1.msra.mxu0 %v2519
  %2521 = vmatprep.subr.mxu0 0.0
  %v2522 = vand.u32 %v475, 4294901760
  %2523 = vmatpush1.msra.mxu0 %v2522
  %2524 = vmatprep.subr.mxu0 0.0
  %v2525 = vand.u32 %v478, 4294901760
  %2526 = vmatpush1.msra.mxu0 %v2525
  %2527 = vmatprep.subr.mxu0 0.0
  %v2528 = vand.u32 %v481, 4294901760
  %2529 = vmatpush1.msra.mxu0 %v2528
  %2530 = vmatprep.subr.mxu0 0.0
  %v2531 = vand.u32 %v484, 4294901760
  %2532 = vmatpush1.msra.mxu0 %v2531
  %2533 = vmatprep.subr.mxu0 0.0
  %v2534 = vand.u32 %v487, 4294901760
  %2535 = vmatpush1.msra.mxu0 %v2534
  %2536 = vmatprep.subr.mxu0 0.0
  %v2537 = vand.u32 %v490, 4294901760
  %2538 = vmatpush1.msra.mxu0 %v2537
  %2539 = vmatprep.subr.mxu0 0.0
  %v2540 = vand.u32 %v493, 4294901760
  %2541 = vmatpush1.msra.mxu0 %v2540
  %2542 = vmatprep.subr.mxu0 0.0
  %v2543 = vand.u32 %v496, 4294901760
  %2544 = vmatpush1.msra.mxu0 %v2543
  %2545 = vmatprep.subr.mxu0 0.0
  %v2546 = vand.u32 %v499, 4294901760
  %2547 = vmatpush1.msra.mxu0 %v2546
  %2548 = vmatprep.subr.mxu0 0.0
  %v2549 = vand.u32 %v502, 4294901760
  %2550 = vmatpush1.msra.mxu0 %v2549
  %2551 = vmatprep.subr.mxu0 0.0
  %v2552 = vand.u32 %v505, 4294901760
  %2553 = vmatpush1.msra.mxu0 %v2552
  %2554 = vmatprep.subr.mxu0 0.0
  %v2555 = vand.u32 %v508, 4294901760
  %2556 = vmatpush1.msra.mxu0 %v2555
  %2557 = vmatprep.subr.mxu0 0.0
  %v2558 = vand.u32 %v511, 4294901760
  %2559 = vmatpush1.msra.mxu0 %v2558
  %2560 = vmatprep.subr.mxu0 0.0
  %v2561 = vand.u32 %v514, 4294901760
  %2562 = vmatpush1.msra.mxu0 %v2561
  %2563 = vmatprep.subr.mxu0 0.0
  %v2564 = vand.u32 %v517, 4294901760
  %2565 = vmatpush1.msra.mxu0 %v2564
  %v2566 = vand.u32 %v417, 4294901760
  %v2567 = vsub.f32 %v417, %v2566
  %v2568 = vand.u32 %v2567, 4294901760
  %2569 = vmatprep.mubr.f32.mxu0 %v2568
  %v2570 = vand.u32 %v416, 4294901760
  %v2571 = vsub.f32 %v416, %v2570
  %v2572 = vand.u32 %v2571, 4294901760
  %2573 = vmatmul.mubr.f32.gmra.mrb[0].mxu0 %v2572
  %v2574 = vpop.f32.mrb[0].mxu0
  %v2575 = vadd.f32 %v2449, %v2574
  %v2576 = vpop.f32.mrb[0].mxu0
  %v2577 = vand.u32 %v419, 4294901760
  %v2578 = vsub.f32 %v419, %v2577
  %v2579 = vand.u32 %v2578, 4294901760
  %2580 = vmatprep.mubr.f32.mxu0 %v2579
  %v2581 = vand.u32 %v418, 4294901760
  %v2582 = vsub.f32 %v418, %v2581
  %v2583 = vand.u32 %v2582, 4294901760
  %2584 = vmatmul.mubr.f32.gmra.mrb[0].mxu0 %v2583
  %v2585 = vpop.f32.mrb[0].mxu0
  %v2586 = vadd.f32 %v2458, %v2585
  %v2587 = vpop.f32.mrb[0].mxu0
  %v2588 = vand.u32 %v421, 4294901760
  %v2589 = vsub.f32 %v421, %v2588
  %v2590 = vand.u32 %v2589, 4294901760
  %2591 = vmatprep.mubr.f32.mxu0 %v2590
  %v2592 = vand.u32 %v420, 4294901760
  %v2593 = vsub.f32 %v420, %v2592
  %v2594 = vand.u32 %v2593, 4294901760
  %2595 = vmatmul.mubr.f32.gmra.mrb[0].mxu0 %v2594
  %v2596 = vpop.f32.mrb[0].mxu0
  %v2597 = vadd.f32 %v2467, %v2596
  %v2598 = vpop.f32.mrb[0].mxu0
  %2599 = vdwg.mxu0
  %2600 = vmatprep.subr.mxu0 0.0
  %v2601 = vand.u32 %v424, 4294901760
  %v2602 = vsub.f32 %v424, %v2601
  %v2603 = vand.u32 %v2602, 4294901760
  %2604 = vmatpush1.msra.mxu0 %v2603
  %2605 = vmatprep.subr.mxu0 0.0
  %v2606 = vand.u32 %v427, 4294901760
  %v2607 = vsub.f32 %v427, %v2606
  %v2608 = vand.u32 %v2607, 4294901760
  %2609 = vmatpush1.msra.mxu0 %v2608
  %2610 = vmatprep.subr.mxu0 0.0
  %v2611 = vand.u32 %v430, 4294901760
  %v2612 = vsub.f32 %v430, %v2611
  %v2613 = vand.u32 %v2612, 4294901760
  %2614 = vmatpush1.msra.mxu0 %v2613
  %2615 = vmatprep.subr.mxu0 0.0
  %v2616 = vand.u32 %v433, 4294901760
  %v2617 = vsub.f32 %v433, %v2616
  %v2618 = vand.u32 %v2617, 4294901760
  %2619 = vmatpush1.msra.mxu0 %v2618
  %2620 = vmatprep.subr.mxu0 0.0
  %v2621 = vand.u32 %v436, 4294901760
  %v2622 = vsub.f32 %v436, %v2621
  %v2623 = vand.u32 %v2622, 4294901760
  %2624 = vmatpush1.msra.mxu0 %v2623
  %2625 = vmatprep.subr.mxu0 0.0
  %v2626 = vand.u32 %v439, 4294901760
  %v2627 = vsub.f32 %v439, %v2626
  %v2628 = vand.u32 %v2627, 4294901760
  %2629 = vmatpush1.msra.mxu0 %v2628
  %2630 = vmatprep.subr.mxu0 0.0
  %v2631 = vand.u32 %v442, 4294901760
  %v2632 = vsub.f32 %v442, %v2631
  %v2633 = vand.u32 %v2632, 4294901760
  %2634 = vmatpush1.msra.mxu0 %v2633
  %2635 = vmatprep.subr.mxu0 0.0
  %v2636 = vand.u32 %v445, 4294901760
  %v2637 = vsub.f32 %v445, %v2636
  %v2638 = vand.u32 %v2637, 4294901760
  %2639 = vmatpush1.msra.mxu0 %v2638
  %2640 = vmatprep.subr.mxu0 0.0
  %v2641 = vand.u32 %v448, 4294901760
  %v2642 = vsub.f32 %v448, %v2641
  %v2643 = vand.u32 %v2642, 4294901760
  %2644 = vmatpush1.msra.mxu0 %v2643
  %2645 = vmatprep.subr.mxu0 0.0
  %v2646 = vand.u32 %v451, 4294901760
  %v2647 = vsub.f32 %v451, %v2646
  %v2648 = vand.u32 %v2647, 4294901760
  %2649 = vmatpush1.msra.mxu0 %v2648
  %2650 = vmatprep.subr.mxu0 0.0
  %v2651 = vand.u32 %v454, 4294901760
  %v2652 = vsub.f32 %v454, %v2651
  %v2653 = vand.u32 %v2652, 4294901760
  %2654 = vmatpush1.msra.mxu0 %v2653
  %2655 = vmatprep.subr.mxu0 0.0
  %v2656 = vand.u32 %v457, 4294901760
  %v2657 = vsub.f32 %v457, %v2656
  %v2658 = vand.u32 %v2657, 4294901760
  %2659 = vmatpush1.msra.mxu0 %v2658
  %2660 = vmatprep.subr.mxu0 0.0
  %v2661 = vand.u32 %v460, 4294901760
  %v2662 = vsub.f32 %v460, %v2661
  %v2663 = vand.u32 %v2662, 4294901760
  %2664 = vmatpush1.msra.mxu0 %v2663
  %2665 = vmatprep.subr.mxu0 0.0
  %v2666 = vand.u32 %v463, 4294901760
  %v2667 = vsub.f32 %v463, %v2666
  %v2668 = vand.u32 %v2667, 4294901760
  %2669 = vmatpush1.msra.mxu0 %v2668
  %2670 = vmatprep.subr.mxu0 0.0
  %v2671 = vand.u32 %v466, 4294901760
  %v2672 = vsub.f32 %v466, %v2671
  %v2673 = vand.u32 %v2672, 4294901760
  %2674 = vmatpush1.msra.mxu0 %v2673
  %2675 = vmatprep.subr.mxu0 0.0
  %v2676 = vand.u32 %v469, 4294901760
  %v2677 = vsub.f32 %v469, %v2676
  %v2678 = vand.u32 %v2677, 4294901760
  %2679 = vmatpush1.msra.mxu0 %v2678
  %2680 = vmatprep.subr.mxu0 0.0
  %v2681 = vand.u32 %v472, 4294901760
  %v2682 = vsub.f32 %v472, %v2681
  %v2683 = vand.u32 %v2682, 4294901760
  %2684 = vmatpush1.msra.mxu0 %v2683
  %2685 = vmatprep.subr.mxu0 0.0
  %v2686 = vand.u32 %v475, 4294901760
  %v2687 = vsub.f32 %v475, %v2686
  %v2688 = vand.u32 %v2687, 4294901760
  %2689 = vmatpush1.msra.mxu0 %v2688
  %2690 = vmatprep.subr.mxu0 0.0
  %v2691 = vand.u32 %v478, 4294901760
  %v2692 = vsub.f32 %v478, %v2691
  %v2693 = vand.u32 %v2692, 4294901760
  %2694 = vmatpush1.msra.mxu0 %v2693
  %2695 = vmatprep.subr.mxu0 0.0
  %v2696 = vand.u32 %v481, 4294901760
  %v2697 = vsub.f32 %v481, %v2696
  %v2698 = vand.u32 %v2697, 4294901760
  %2699 = vmatpush1.msra.mxu0 %v2698
  %2700 = vmatprep.subr.mxu0 0.0
  %v2701 = vand.u32 %v484, 4294901760
  %v2702 = vsub.f32 %v484, %v2701
  %v2703 = vand.u32 %v2702, 4294901760
  %2704 = vmatpush1.msra.mxu0 %v2703
  %2705 = vmatprep.subr.mxu0 0.0
  %v2706 = vand.u32 %v487, 4294901760
  %v2707 = vsub.f32 %v487, %v2706
  %v2708 = vand.u32 %v2707, 4294901760
  %2709 = vmatpush1.msra.mxu0 %v2708
  %2710 = vmatprep.subr.mxu0 0.0
  %v2711 = vand.u32 %v490, 4294901760
  %v2712 = vsub.f32 %v490, %v2711
  %v2713 = vand.u32 %v2712, 4294901760
  %2714 = vmatpush1.msra.mxu0 %v2713
  %2715 = vmatprep.subr.mxu0 0.0
  %v2716 = vand.u32 %v493, 4294901760
  %v2717 = vsub.f32 %v493, %v2716
  %v2718 = vand.u32 %v2717, 4294901760
  %2719 = vmatpush1.msra.mxu0 %v2718
  %2720 = vmatprep.subr.mxu0 0.0
  %v2721 = vand.u32 %v496, 4294901760
  %v2722 = vsub.f32 %v496, %v2721
  %v2723 = vand.u32 %v2722, 4294901760
  %2724 = vmatpush1.msra.mxu0 %v2723
  %2725 = vmatprep.subr.mxu0 0.0
  %v2726 = vand.u32 %v499, 4294901760
  %v2727 = vsub.f32 %v499, %v2726
  %v2728 = vand.u32 %v2727, 4294901760
  %2729 = vmatpush1.msra.mxu0 %v2728
  %2730 = vmatprep.subr.mxu0 0.0
  %v2731 = vand.u32 %v502, 4294901760
  %v2732 = vsub.f32 %v502, %v2731
  %v2733 = vand.u32 %v2732, 4294901760
  %2734 = vmatpush1.msra.mxu0 %v2733
  %2735 = vmatprep.subr.mxu0 0.0
  %v2736 = vand.u32 %v505, 4294901760
  %v2737 = vsub.f32 %v505, %v2736
  %v2738 = vand.u32 %v2737, 4294901760
  %2739 = vmatpush1.msra.mxu0 %v2738
  %2740 = vmatprep.subr.mxu0 0.0
  %v2741 = vand.u32 %v508, 4294901760
  %v2742 = vsub.f32 %v508, %v2741
  %v2743 = vand.u32 %v2742, 4294901760
  %2744 = vmatpush1.msra.mxu0 %v2743
  %2745 = vmatprep.subr.mxu0 0.0
  %v2746 = vand.u32 %v511, 4294901760
  %v2747 = vsub.f32 %v511, %v2746
  %v2748 = vand.u32 %v2747, 4294901760
  %2749 = vmatpush1.msra.mxu0 %v2748
  %2750 = vmatprep.subr.mxu0 0.0
  %v2751 = vand.u32 %v514, 4294901760
  %v2752 = vsub.f32 %v514, %v2751
  %v2753 = vand.u32 %v2752, 4294901760
  %2754 = vmatpush1.msra.mxu0 %v2753
  %2755 = vmatprep.subr.mxu0 0.0
  %v2756 = vand.u32 %v517, 4294901760
  %v2757 = vsub.f32 %v517, %v2756
  %v2758 = vand.u32 %v2757, 4294901760
  %2759 = vmatpush1.msra.mxu0 %v2758
  %v2760 = vand.u32 %v417, 4294901760
  %2761 = vmatprep.mubr.f32.mxu0 %v2760
  %v2762 = vand.u32 %v416, 4294901760
  %2763 = vmatmul.mubr.f32.gmra.mrb[0].mxu0 %v2762
  %v2764 = vpop.f32.mrb[0].mxu0
  %v2765 = vadd.f32 %v2575, %v2764
  %v2766 = vpop.f32.mrb[0].mxu0
  %v2767 = vand.u32 %v419, 4294901760
  %2768 = vmatprep.mubr.f32.mxu0 %v2767
  %v2769 = vand.u32 %v418, 4294901760
  %2770 = vmatmul.mubr.f32.gmra.mrb[0].mxu0 %v2769
  %v2771 = vpop.f32.mrb[0].mxu0
  %v2772 = vadd.f32 %v2586, %v2771
  %v2773 = vpop.f32.mrb[0].mxu0
  %v2774 = vand.u32 %v421, 4294901760
  %2775 = vmatprep.mubr.f32.mxu0 %v2774
  %v2776 = vand.u32 %v420, 4294901760
  %2777 = vmatmul.mubr.f32.gmra.mrb[0].mxu0 %v2776
  %v2778 = vpop.f32.mrb[0].mxu0
  %v2779 = vadd.f32 %v2597, %v2778
  %v2780 = vpop.f32.mrb[0].mxu0
  %2781 = vdwg.mxu0
  %2782 = vmatprep.subr.mxu0 0.0
  %v2783 = vand.u32 %v424, 4294901760
  %2784 = vmatpush1.msra.mxu0 %v2783
  %2785 = vmatprep.subr.mxu0 0.0
  %v2786 = vand.u32 %v427, 4294901760
  %2787 = vmatpush1.msra.mxu0 %v2786
  %2788 = vmatprep.subr.mxu0 0.0
  %v2789 = vand.u32 %v430, 4294901760
  %2790 = vmatpush1.msra.mxu0 %v2789
  %2791 = vmatprep.subr.mxu0 0.0
  %v2792 = vand.u32 %v433, 4294901760
  %2793 = vmatpush1.msra.mxu0 %v2792
  %2794 = vmatprep.subr.mxu0 0.0
  %v2795 = vand.u32 %v436, 4294901760
  %2796 = vmatpush1.msra.mxu0 %v2795
  %2797 = vmatprep.subr.mxu0 0.0
  %v2798 = vand.u32 %v439, 4294901760
  %2799 = vmatpush1.msra.mxu0 %v2798
  %2800 = vmatprep.subr.mxu0 0.0
  %v2801 = vand.u32 %v442, 4294901760
  %2802 = vmatpush1.msra.mxu0 %v2801
  %2803 = vmatprep.subr.mxu0 0.0
  %v2804 = vand.u32 %v445, 4294901760
  %2805 = vmatpush1.msra.mxu0 %v2804
  %2806 = vmatprep.subr.mxu0 0.0
  %v2807 = vand.u32 %v448, 4294901760
  %2808 = vmatpush1.msra.mxu0 %v2807
  %2809 = vmatprep.subr.mxu0 0.0
  %v2810 = vand.u32 %v451, 4294901760
  %2811 = vmatpush1.msra.mxu0 %v2810
  %2812 = vmatprep.subr.mxu0 0.0
  %v2813 = vand.u32 %v454, 4294901760
  %2814 = vmatpush1.msra.mxu0 %v2813
  %2815 = vmatprep.subr.mxu0 0.0
  %v2816 = vand.u32 %v457, 4294901760
  %2817 = vmatpush1.msra.mxu0 %v2816
  %2818 = vmatprep.subr.mxu0 0.0
  %v2819 = vand.u32 %v460, 4294901760
  %2820 = vmatpush1.msra.mxu0 %v2819
  %2821 = vmatprep.subr.mxu0 0.0
  %v2822 = vand.u32 %v463, 4294901760
  %2823 = vmatpush1.msra.mxu0 %v2822
  %2824 = vmatprep.subr.mxu0 0.0
  %v2825 = vand.u32 %v466, 4294901760
  %2826 = vmatpush1.msra.mxu0 %v2825
  %2827 = vmatprep.subr.mxu0 0.0
  %v2828 = vand.u32 %v469, 4294901760
  %2829 = vmatpush1.msra.mxu0 %v2828
  %2830 = vmatprep.subr.mxu0 0.0
  %v2831 = vand.u32 %v472, 4294901760
  %2832 = vmatpush1.msra.mxu0 %v2831
  %2833 = vmatprep.subr.mxu0 0.0
  %v2834 = vand.u32 %v475, 4294901760
  %2835 = vmatpush1.msra.mxu0 %v2834
  %2836 = vmatprep.subr.mxu0 0.0
  %v2837 = vand.u32 %v478, 4294901760
  %2838 = vmatpush1.msra.mxu0 %v2837
  %2839 = vmatprep.subr.mxu0 0.0
  %v2840 = vand.u32 %v481, 4294901760
  %2841 = vmatpush1.msra.mxu0 %v2840
  %2842 = vmatprep.subr.mxu0 0.0
  %v2843 = vand.u32 %v484, 4294901760
  %2844 = vmatpush1.msra.mxu0 %v2843
  %2845 = vmatprep.subr.mxu0 0.0
  %v2846 = vand.u32 %v487, 4294901760
  %2847 = vmatpush1.msra.mxu0 %v2846
  %2848 = vmatprep.subr.mxu0 0.0
  %v2849 = vand.u32 %v490, 4294901760
  %2850 = vmatpush1.msra.mxu0 %v2849
  %2851 = vmatprep.subr.mxu0 0.0
  %v2852 = vand.u32 %v493, 4294901760
  %2853 = vmatpush1.msra.mxu0 %v2852
  %2854 = vmatprep.subr.mxu0 0.0
  %v2855 = vand.u32 %v496, 4294901760
  %2856 = vmatpush1.msra.mxu0 %v2855
  %2857 = vmatprep.subr.mxu0 0.0
  %v2858 = vand.u32 %v499, 4294901760
  %2859 = vmatpush1.msra.mxu0 %v2858
  %2860 = vmatprep.subr.mxu0 0.0
  %v2861 = vand.u32 %v502, 4294901760
  %2862 = vmatpush1.msra.mxu0 %v2861
  %2863 = vmatprep.subr.mxu0 0.0
  %v2864 = vand.u32 %v505, 4294901760
  %2865 = vmatpush1.msra.mxu0 %v2864
  %2866 = vmatprep.subr.mxu0 0.0
  %v2867 = vand.u32 %v508, 4294901760
  %2868 = vmatpush1.msra.mxu0 %v2867
  %2869 = vmatprep.subr.mxu0 0.0
  %v2870 = vand.u32 %v511, 4294901760
  %2871 = vmatpush1.msra.mxu0 %v2870
  %2872 = vmatprep.subr.mxu0 0.0
  %v2873 = vand.u32 %v514, 4294901760
  %2874 = vmatpush1.msra.mxu0 %v2873
  %2875 = vmatprep.subr.mxu0 0.0
  %v2876 = vand.u32 %v517, 4294901760
  %2877 = vmatpush1.msra.mxu0 %v2876
  %v2878 = vand.u32 %v417, 4294901760
  %2879 = vmatprep.mubr.f32.mxu0 %v2878
  %v2880 = vand.u32 %v416, 4294901760
  %2881 = vmatmul.mubr.f32.gmra.mrb[0].mxu0 %v2880
  %v2882 = vpop.f32.mrb[0].mxu0
  %v2883 = vadd.f32 %v2765, %v2882
  %v2884 = vpop.f32.mrb[0].mxu0
  %v2885 = vand.u32 %v419, 4294901760
  %2886 = vmatprep.mubr.f32.mxu0 %v2885
  %v2887 = vand.u32 %v418, 4294901760
  %2888 = vmatmul.mubr.f32.gmra.mrb[0].mxu0 %v2887
  %v2889 = vpop.f32.mrb[0].mxu0
  %v2890 = vadd.f32 %v2772, %v2889
  %v2891 = vpop.f32.mrb[0].mxu0
  %v2892 = vand.u32 %v421, 4294901760
  %2893 = vmatprep.mubr.f32.mxu0 %v2892
  %v2894 = vand.u32 %v420, 4294901760
  %2895 = vmatmul.mubr.f32.gmra.mrb[0].mxu0 %v2894
  %v2896 = vpop.f32.mrb[0].mxu0
  %v2897 = vadd.f32 %v2779, %v2896
  %v2898 = vpop.f32.mrb[0].mxu0
  %2899 = vdwg.mxu0
  %2900 = vst [vmem:[%s3] sm:$0xff] %v1906
  %2901 = vst [vmem:[%s3 + $0x8] sm:$0xff] %v1908
  %2902 = vst [vmem:[%s3 + $0x10] sm:$0xff] %v2883
  %2903 = vst [vmem:[%s3 + $0x18] sm:$0xff] %v1914
  %2904 = vst [vmem:[%s3 + $0x20] sm:$0xff] %v1916
  %2905 = vst [vmem:[%s3 + $0x28] sm:$0xff] %v2890
  %2906 = vst [vmem:[%s3 + $0x30] sm:$0xff] %v1922
  %2907 = vst [vmem:[%s3 + $0x38] sm:$0xff] %v1924
  %2908 = vst [vmem:[%s3 + $0x40] sm:$0xff] %v2897
  // Predicated region
  $region14: #{input_module_forward.1} parent=0 // pred_check
    _
  $region15: #{input_module_forward.1} parent=0 // pred_check_branch
    %2910 = sbr.rel (0) target = $region17
  $region16: #{input_module_forward.1} parent=0 // pred_region
    _
  $region17: #{input_module_forward.1} parent=0 // pred_fallthru
    _
  // Predicated region
  $region18: #{input_module_forward.1} parent=0 // pred_check
    _
  $region19: #{input_module_forward.1} parent=0 // pred_check_branch
    %2912 = sbr.rel (0) target = $region21
  $region20: #{input_module_forward.1} parent=0 // pred_region
    _
  $region21: #{input_module_forward.1} parent=0 // pred_fallthru
    _

</llo_original>
